<compile_context>
chip_gen: v5e
topology: v5e:2x2
jax: 0.10.0
libtpu: 0.0.40
codegen_flags: <defaults>
</compile_context>

<pallas_src>
import jax
import jax.numpy as jnp
from jax import lax
from jax.experimental import pallas as pl
from jax.experimental.pallas import tpu as pltpu

# Model hyper-parameters (small, consistent with the module's __init__).
VOCAB = 64
EMBED = 32
HIDDEN = 32
LAYERS = 2          # kernel below is written for exactly 2 layers
BATCH = 2
SEQ = 8


def _activate(gates, is_g):
    """Full-width gate nonlinearity: tanh on g-lanes, sigmoid elsewhere."""
    return jnp.where(is_g, jnp.tanh(gates), jax.nn.sigmoid(gates))


def lstm_fc_kernel(tok_ref,                       # VMEM (T*B, 1) int32, time-major
                   emb_ref,                       # (VOCAB, E)
                   wih0_ref, whh0_ref, b0_ref,    # (E,4H) (H,4H) (1,4H)
                   wih1_ref, whh1_ref, b1_ref,    # (H,4H) (H,4H) (1,4H)
                   fcw_ref, fcb_ref,              # (H,V)  (1,V)
                   out_ref):                      # (B, V)
    TB = tok_ref.shape[0]
    H = whh0_ref.shape[0]
    B = out_ref.shape[0]
    T = TB // B
    f32 = jnp.float32

    # ---- Embedding via one one-hot MXU matmul (no dynamic gathers).
    lane_v = lax.broadcasted_iota(jnp.int32, (TB, emb_ref.shape[0]), 1)
    onehot = (lane_v == tok_ref[...]).astype(f32)                       # (T*B, V)
    xflat = jnp.dot(onehot, emb_ref[...], preferred_element_type=f32)   # (T*B, E)

    # ---- Layer-0 input projection for the whole sequence (one matmul).
    gin0 = jnp.dot(xflat, wih0_ref[...], preferred_element_type=f32) + b0_ref[...]

    # ---- Combined wavefront weight, gate-major columns [i0 i1 f0 f1 g0 g1 o0 o1]:
    #   rows 0..H-1   (h0 contribution): Whh0 -> layer-0 gates, Wih1 -> layer-1 gates
    #   rows H..2H-1  (h1 contribution): 0    -> layer-0 gates, Whh1 -> layer-1 gates
    whh0 = whh0_ref[...]
    whh1 = whh1_ref[...]
    wih1 = wih1_ref[...]
    zeroH = jnp.zeros((H, H), f32)
    top_cols, bot_cols = [], []
    for g in range(4):
        top_cols.append(whh0[:, g * H:(g + 1) * H])
        top_cols.append(wih1[:, g * H:(g + 1) * H])
        bot_cols.append(zeroH)
        bot_cols.append(whh1[:, g * H:(g + 1) * H])
    w_blk = jnp.concatenate(
        [jnp.concatenate(top_cols, axis=-1),
         jnp.concatenate(bot_cols, axis=-1)], axis=0)                   # (2H, 8H)

    # ---- Per-step additive gate inputs in the same gate-major layout.
    # Layer-0 columns: gin0 block for time s; layer-1 columns: just b1 (its
    # x-projection depends on the recurrence and is folded into w_blk).
    # One extra zero block so the last wavefront step (layer-1 only) is uniform.
    b1 = b1_ref[...]
    gin_ext = jnp.concatenate([gin0, jnp.zeros((B, 4 * H), f32)], axis=0)
    gparts = []
    for g in range(4):
        gparts.append(gin_ext[:, g * H:(g + 1) * H])
        gparts.append(jnp.broadcast_to(b1[:, g * H:(g + 1) * H], ((T + 1) * B, H)))
    gin_full = jnp.concatenate(gparts, axis=-1)                         # ((T+1)*B, 8H)

    # Gate masks (tanh lanes) for standard (4H) and gate-major combined (8H) tiles.
    lane4 = lax.broadcasted_iota(jnp.int32, (B, 4 * H), 1)
    is_g4 = (lane4 >= 2 * H) & (lane4 < 3 * H)
    lane8 = lax.broadcasted_iota(jnp.int32, (B, 8 * H), 1)
    is_g8 = (lane8 >= 4 * H) & (lane8 < 6 * H)

    # ---- Step 0: layer 0 only (h0_{-1}=0 -> no recurrent matmul needed).
    act0 = _activate(gin0[0:B, :], is_g4)
    c0 = act0[:, 0:H] * act0[:, 2 * H:3 * H]          # i*g  (f*c0_{-1} term is 0)
    h0 = act0[:, 3 * H:4 * H] * jnp.tanh(c0)

    hcat = jnp.concatenate([h0, jnp.zeros((B, H), f32)], axis=-1)   # [h0_t | h1_{t-1}]
    ccat = jnp.concatenate([c0, jnp.zeros((B, H), f32)], axis=-1)   # [c0_t | c1_{t-1}]

    # ---- Wavefront recurrence: T serial matmuls instead of 2T.
    # Step s computes layer-0 gates for t=s and layer-1 gates for t=s-1.
    for s in range(1, T + 1):                         # fully unrolled (T static)
        gates = gin_full[s * B:(s + 1) * B, :] + jnp.dot(
            hcat, w_blk, preferred_element_type=f32)                   # (B, 8H)
        act = _activate(gates, is_g8)
        ccat = act[:, 2 * H:4 * H] * ccat + act[:, 0:2 * H] * act[:, 4 * H:6 * H]
        hcat = act[:, 6 * H:8 * H] * jnp.tanh(ccat)
    # After s=T the layer-0 half is a dummy; the layer-1 half holds h1_{T-1}.

    # ---- FC head on the last timestep's layer-1 hidden state.
    out_ref[...] = jnp.dot(hcat[:, H:2 * H], fcw_ref[...],
                           preferred_element_type=f32) + fcb_ref[...]


def lstm_model_forward(tokens, params):
    """tokens: int32 (B, T). Returns logits (B, VOCAB)."""
    B, T = tokens.shape
    # Layout plumbing only: time-major flattened token ids, row t*B + b.
    tok_tm = tokens.astype(jnp.int32).T.reshape(T * B, 1)
    vmem = pl.BlockSpec(memory_space=pltpu.MemorySpace.VMEM)
    return pl.pallas_call(
        lstm_fc_kernel,
        out_shape=jax.ShapeDtypeStruct((B, VOCAB), jnp.float32),
        in_specs=[vmem] * 10,
        out_specs=vmem,
    )(tok_tm,
      params["embedding"],
      params["wih0"], params["whh0"], params["b0"],
      params["wih1"], params["whh1"], params["b1"],
      params["fcw"], params["fcb"])


def init_params(key):
    """Deterministic synthetic params mimicking PyTorch shapes (stored transposed)."""
    ks = jax.random.split(key, 12)
    s = 1.0 / (HIDDEN ** 0.5)

    def u(k, shape):
        return jax.random.uniform(k, shape, jnp.float32, -s, s)

    return {
        "embedding": jax.random.normal(ks[0], (VOCAB, EMBED), jnp.float32),
        # layer 0 (PyTorch: weight_ih_l0 (4H,E), weight_hh_l0 (4H,H), 2 biases (4H,))
        "wih0": u(ks[1], (EMBED, 4 * HIDDEN)),
        "whh0": u(ks[2], (HIDDEN, 4 * HIDDEN)),
        "b0":   u(ks[3], (1, 4 * HIDDEN)) + u(ks[4], (1, 4 * HIDDEN)),
        # layer 1
        "wih1": u(ks[5], (HIDDEN, 4 * HIDDEN)),
        "whh1": u(ks[6], (HIDDEN, 4 * HIDDEN)),
        "b1":   u(ks[7], (1, 4 * HIDDEN)) + u(ks[8], (1, 4 * HIDDEN)),
        # fc (PyTorch: (V,H) + (V,))
        "fcw":  u(ks[9], (HIDDEN, VOCAB)),
        "fcb":  u(ks[10], (1, VOCAB)),
    }


def reference_forward(tokens, params):
    """Pure-JAX reference matching PyTorch LSTM semantics (zero initial state)."""
    emb = params["embedding"][tokens]             # (B, T, E)

    def run_layer(x_btd, wih, whh, b):
        B = x_btd.shape[0]
        H = whh.shape[0]

        def step(carry, x_t):
            h, c = carry
            gates = x_t @ wih + h @ whh + b
            i, f, g, o = jnp.split(gates, 4, axis=-1)
            c = jax.nn.sigmoid(f) * c + jax.nn.sigmoid(i) * jnp.tanh(g)
            h = jax.nn.sigmoid(o) * jnp.tanh(c)
            return (h, c), h

        init = (jnp.zeros((B, H), jnp.float32), jnp.zeros((B, H), jnp.float32))
        _, hs = lax.scan(step, init, jnp.transpose(x_btd, (1, 0, 2)))
        return jnp.transpose(hs, (1, 0, 2))       # (B, T, H)

    h = run_layer(emb, params["wih0"], params["whh0"], params["b0"])
    h = run_layer(h, params["wih1"], params["whh1"], params["b1"])
    return h[:, -1, :] @ params["fcw"] + params["fcb"]


if __name__ == "__main__":
    key = jax.random.PRNGKey(0)
    k_tok, k_par = jax.random.split(key)
    tokens = jax.random.randint(k_tok, (BATCH, SEQ), 0, VOCAB, dtype=jnp.int32)
    params = init_params(k_par)

    fwd = jax.jit(lstm_model_forward)
    logits = jax.block_until_ready(fwd(tokens, params))
    ref = jax.block_until_ready(reference_forward(tokens, params))

    assert logits.shape == (BATCH, VOCAB)
    assert jnp.allclose(logits, ref, atol=1e-3, rtol=1e-3), "mismatch vs reference"
    print("KERNEL_OK")
</pallas_src>

<mosaic_0001>
module attributes {stable_mosaic.version = 11 : i64} {
  func.func @lstm_fc_kernel(%arg0: memref<16x1xi32, #tpu.memory_space<vmem>>, %arg1: memref<64x32xf32, #tpu.memory_space<vmem>>, %arg2: memref<32x128xf32, #tpu.memory_space<vmem>>, %arg3: memref<32x128xf32, #tpu.memory_space<vmem>>, %arg4: memref<1x128xf32, #tpu.memory_space<vmem>>, %arg5: memref<32x128xf32, #tpu.memory_space<vmem>>, %arg6: memref<32x128xf32, #tpu.memory_space<vmem>>, %arg7: memref<1x128xf32, #tpu.memory_space<vmem>>, %arg8: memref<32x64xf32, #tpu.memory_space<vmem>>, %arg9: memref<1x64xf32, #tpu.memory_space<vmem>>, %arg10: memref<2x64xf32, #tpu.memory_space<vmem>>) attributes {dimension_semantics = [], scalar_prefetch = 0 : i64, scratch_operands = 0 : i64, tpu.core_type = #tpu.core_type<tc>} {
    %0 = tpu.iota {dimensions = array<i32: 1>} : vector<16x64xi32>
    %c0 = arith.constant 0 : index
    %c0_0 = arith.constant 0 : index
    %1 = vector.load %arg0[%c0, %c0_0] : memref<16x1xi32, #tpu.memory_space<vmem>>, vector<16x1xi32>
    %2 = vector.broadcast %1 : vector<16x1xi32> to vector<16x64xi32>
    %3 = arith.cmpi eq, %0, %2 : vector<16x64xi32>
    %4 = arith.extui %3 : vector<16x64xi1> to vector<16x64xi32>
    %5 = arith.sitofp %4 : vector<16x64xi32> to vector<16x64xf32>
    %c0_1 = arith.constant 0 : index
    %c0_2 = arith.constant 0 : index
    %6 = vector.load %arg1[%c0_1, %c0_2] : memref<64x32xf32, #tpu.memory_space<vmem>>, vector<64x32xf32>
    %cst = arith.constant dense<0.000000e+00> : vector<16x32xf32>
    %7 = tpu.matmul %5, %6, %cst {dimension_numbers = #tpu.dot_dimension_numbers<[1], [0], [0], [1], [0, 0, 1, 1], [], []>} : vector<16x64xf32>, vector<64x32xf32>, vector<16x32xf32> -> vector<16x32xf32>
    %c0_3 = arith.constant 0 : index
    %c0_4 = arith.constant 0 : index
    %8 = vector.load %arg2[%c0_3, %c0_4] : memref<32x128xf32, #tpu.memory_space<vmem>>, vector<32x128xf32>
    %cst_5 = arith.constant dense<0.000000e+00> : vector<16x128xf32>
    %9 = tpu.matmul %7, %8, %cst_5 {dimension_numbers = #tpu.dot_dimension_numbers<[1], [0], [0], [1], [0, 0, 1, 1], [], []>} : vector<16x32xf32>, vector<32x128xf32>, vector<16x128xf32> -> vector<16x128xf32>
    %c0_6 = arith.constant 0 : index
    %c0_7 = arith.constant 0 : index
    %10 = vector.load %arg4[%c0_6, %c0_7] : memref<1x128xf32, #tpu.memory_space<vmem>>, vector<1x128xf32>
    %11 = vector.broadcast %10 : vector<1x128xf32> to vector<16x128xf32>
    %12 = arith.addf %9, %11 : vector<16x128xf32>
    %c0_8 = arith.constant 0 : index
    %c0_9 = arith.constant 0 : index
    %13 = vector.load %arg3[%c0_8, %c0_9] : memref<32x128xf32, #tpu.memory_space<vmem>>, vector<32x128xf32>
    %c0_10 = arith.constant 0 : index
    %c0_11 = arith.constant 0 : index
    %14 = vector.load %arg6[%c0_10, %c0_11] : memref<32x128xf32, #tpu.memory_space<vmem>>, vector<32x128xf32>
    %c0_12 = arith.constant 0 : index
    %c0_13 = arith.constant 0 : index
    %15 = vector.load %arg5[%c0_12, %c0_13] : memref<32x128xf32, #tpu.memory_space<vmem>>, vector<32x128xf32>
    %cst_14 = arith.constant 0.000000e+00 : f32
    %16 = vector.broadcast %cst_14 : f32 to vector<32x32xf32>
    %17 = vector.extract_strided_slice %13 {offsets = [0, 0], sizes = [32, 32], strides = [1, 1]} : vector<32x128xf32> to vector<32x32xf32>
    %18 = vector.extract_strided_slice %15 {offsets = [0, 0], sizes = [32, 32], strides = [1, 1]} : vector<32x128xf32> to vector<32x32xf32>
    %19 = vector.extract_strided_slice %14 {offsets = [0, 0], sizes = [32, 32], strides = [1, 1]} : vector<32x128xf32> to vector<32x32xf32>
    %20 = vector.extract_strided_slice %13 {offsets = [0, 32], sizes = [32, 32], strides = [1, 1]} : vector<32x128xf32> to vector<32x32xf32>
    %21 = vector.extract_strided_slice %15 {offsets = [0, 32], sizes = [32, 32], strides = [1, 1]} : vector<32x128xf32> to vector<32x32xf32>
    %22 = vector.extract_strided_slice %14 {offsets = [0, 32], sizes = [32, 32], strides = [1, 1]} : vector<32x128xf32> to vector<32x32xf32>
    %23 = vector.extract_strided_slice %13 {offsets = [0, 64], sizes = [32, 32], strides = [1, 1]} : vector<32x128xf32> to vector<32x32xf32>
    %24 = vector.extract_strided_slice %15 {offsets = [0, 64], sizes = [32, 32], strides = [1, 1]} : vector<32x128xf32> to vector<32x32xf32>
    %25 = vector.extract_strided_slice %14 {offsets = [0, 64], sizes = [32, 32], strides = [1, 1]} : vector<32x128xf32> to vector<32x32xf32>
    %26 = vector.extract_strided_slice %13 {offsets = [0, 96], sizes = [32, 32], strides = [1, 1]} : vector<32x128xf32> to vector<32x32xf32>
    %27 = vector.extract_strided_slice %15 {offsets = [0, 96], sizes = [32, 32], strides = [1, 1]} : vector<32x128xf32> to vector<32x32xf32>
    %28 = vector.extract_strided_slice %14 {offsets = [0, 96], sizes = [32, 32], strides = [1, 1]} : vector<32x128xf32> to vector<32x32xf32>
    %29 = tpu.concatenate %17, %18, %20, %21, %23, %24, %26, %27 in 1 : vector<32x32xf32>, vector<32x32xf32>, vector<32x32xf32>, vector<32x32xf32>, vector<32x32xf32>, vector<32x32xf32>, vector<32x32xf32>, vector<32x32xf32> -> vector<32x256xf32>
    %30 = tpu.concatenate %16, %19, %16, %22, %16, %25, %16, %28 in 1 : vector<32x32xf32>, vector<32x32xf32>, vector<32x32xf32>, vector<32x32xf32>, vector<32x32xf32>, vector<32x32xf32>, vector<32x32xf32>, vector<32x32xf32> -> vector<32x256xf32>
    %31 = tpu.concatenate %29, %30 in 0 : vector<32x256xf32>, vector<32x256xf32> -> vector<64x256xf32>
    %c0_15 = arith.constant 0 : index
    %c0_16 = arith.constant 0 : index
    %32 = vector.load %arg7[%c0_15, %c0_16] : memref<1x128xf32, #tpu.memory_space<vmem>>, vector<1x128xf32>
    %cst_17 = arith.constant 0.000000e+00 : f32
    %33 = vector.broadcast %cst_17 : f32 to vector<2x128xf32>
    %34 = tpu.concatenate %12, %33 in 0 : vector<16x128xf32>, vector<2x128xf32> -> vector<18x128xf32>
    %35 = vector.extract_strided_slice %34 {offsets = [0, 0], sizes = [18, 32], strides = [1, 1]} : vector<18x128xf32> to vector<18x32xf32>
    %36 = vector.extract_strided_slice %32 {offsets = [0, 0], sizes = [1, 32], strides = [1, 1]} : vector<1x128xf32> to vector<1x32xf32>
    %37 = vector.shape_cast %36 : vector<1x32xf32> to vector<1x32xf32>
    %38 = vector.broadcast %37 : vector<1x32xf32> to vector<18x32xf32>
    %39 = vector.extract_strided_slice %34 {offsets = [0, 32], sizes = [18, 32], strides = [1, 1]} : vector<18x128xf32> to vector<18x32xf32>
    %40 = vector.extract_strided_slice %32 {offsets = [0, 32], sizes = [1, 32], strides = [1, 1]} : vector<1x128xf32> to vector<1x32xf32>
    %41 = vector.shape_cast %40 : vector<1x32xf32> to vector<1x32xf32>
    %42 = vector.broadcast %41 : vector<1x32xf32> to vector<18x32xf32>
    %43 = vector.extract_strided_slice %34 {offsets = [0, 64], sizes = [18, 32], strides = [1, 1]} : vector<18x128xf32> to vector<18x32xf32>
    %44 = vector.extract_strided_slice %32 {offsets = [0, 64], sizes = [1, 32], strides = [1, 1]} : vector<1x128xf32> to vector<1x32xf32>
    %45 = vector.shape_cast %44 : vector<1x32xf32> to vector<1x32xf32>
    %46 = vector.broadcast %45 : vector<1x32xf32> to vector<18x32xf32>
    %47 = vector.extract_strided_slice %34 {offsets = [0, 96], sizes = [18, 32], strides = [1, 1]} : vector<18x128xf32> to vector<18x32xf32>
    %48 = vector.extract_strided_slice %32 {offsets = [0, 96], sizes = [1, 32], strides = [1, 1]} : vector<1x128xf32> to vector<1x32xf32>
    %49 = vector.shape_cast %48 : vector<1x32xf32> to vector<1x32xf32>
    %50 = vector.broadcast %49 : vector<1x32xf32> to vector<18x32xf32>
    %51 = tpu.concatenate %35, %38, %39, %42, %43, %46, %47, %50 in 1 : vector<18x32xf32>, vector<18x32xf32>, vector<18x32xf32>, vector<18x32xf32>, vector<18x32xf32>, vector<18x32xf32>, vector<18x32xf32>, vector<18x32xf32> -> vector<18x256xf32>
    %52 = tpu.iota {dimensions = array<i32: 1>} : vector<2x128xi32>
    %c64_i32 = arith.constant 64 : i32
    %53 = vector.broadcast %c64_i32 : i32 to vector<2x128xi32>
    %54 = arith.cmpi sge, %52, %53 : vector<2x128xi32>
    %c96_i32 = arith.constant 96 : i32
    %55 = vector.broadcast %c96_i32 : i32 to vector<2x128xi32>
    %56 = arith.cmpi slt, %52, %55 : vector<2x128xi32>
    %57 = arith.andi %54, %56 : vector<2x128xi1>
    %58 = tpu.iota {dimensions = array<i32: 1>} : vector<2x256xi32>
    %c128_i32 = arith.constant 128 : i32
    %59 = vector.broadcast %c128_i32 : i32 to vector<2x256xi32>
    %60 = arith.cmpi sge, %58, %59 : vector<2x256xi32>
    %c192_i32 = arith.constant 192 : i32
    %61 = vector.broadcast %c192_i32 : i32 to vector<2x256xi32>
    %62 = arith.cmpi slt, %58, %61 : vector<2x256xi32>
    %63 = arith.andi %60, %62 : vector<2x256xi1>
    %64 = vector.extract_strided_slice %12 {offsets = [0, 0], sizes = [2, 128], strides = [1, 1]} : vector<16x128xf32> to vector<2x128xf32>
    %65 = math.tanh %64 : vector<2x128xf32>
    %66 = arith.negf %64 : vector<2x128xf32>
    %67 = math.exp %66 : vector<2x128xf32>
    %cst_18 = arith.constant 1.000000e+00 : f32
    %68 = vector.broadcast %cst_18 : f32 to vector<2x128xf32>
    %69 = arith.addf %68, %67 : vector<2x128xf32>
    %70 = arith.divf %68, %69 : vector<2x128xf32>
    %71 = arith.select %57, %65, %70 : vector<2x128xi1>, vector<2x128xf32>
    %72 = vector.extract_strided_slice %71 {offsets = [0, 0], sizes = [2, 32], strides = [1, 1]} : vector<2x128xf32> to vector<2x32xf32>
    %73 = vector.extract_strided_slice %71 {offsets = [0, 64], sizes = [2, 32], strides = [1, 1]} : vector<2x128xf32> to vector<2x32xf32>
    %74 = arith.mulf %72, %73 : vector<2x32xf32>
    %75 = vector.extract_strided_slice %71 {offsets = [0, 96], sizes = [2, 32], strides = [1, 1]} : vector<2x128xf32> to vector<2x32xf32>
    %76 = math.tanh %74 : vector<2x32xf32>
    %77 = arith.mulf %75, %76 : vector<2x32xf32>
    %cst_19 = arith.constant 0.000000e+00 : f32
    %78 = vector.broadcast %cst_19 : f32 to vector<2x32xf32>
    %79 = tpu.concatenate %77, %78 in 1 : vector<2x32xf32>, vector<2x32xf32> -> vector<2x64xf32>
    %cst_20 = arith.constant 0.000000e+00 : f32
    %80 = vector.broadcast %cst_20 : f32 to vector<2x32xf32>
    %81 = tpu.concatenate %74, %80 in 1 : vector<2x32xf32>, vector<2x32xf32> -> vector<2x64xf32>
    %82 = vector.extract_strided_slice %51 {offsets = [2, 0], sizes = [2, 256], strides = [1, 1]} : vector<18x256xf32> to vector<2x256xf32>
    %cst_21 = arith.constant dense<0.000000e+00> : vector<2x256xf32>
    %83 = tpu.matmul %79, %31, %cst_21 {dimension_numbers = #tpu.dot_dimension_numbers<[1], [0], [0], [1], [0, 0, 1, 1], [], []>} : vector<2x64xf32>, vector<64x256xf32>, vector<2x256xf32> -> vector<2x256xf32>
    %84 = arith.addf %82, %83 : vector<2x256xf32>
    %85 = math.tanh %84 : vector<2x256xf32>
    %86 = arith.negf %84 : vector<2x256xf32>
    %87 = math.exp %86 : vector<2x256xf32>
    %cst_22 = arith.constant 1.000000e+00 : f32
    %88 = vector.broadcast %cst_22 : f32 to vector<2x256xf32>
    %89 = arith.addf %88, %87 : vector<2x256xf32>
    %90 = arith.divf %88, %89 : vector<2x256xf32>
    %91 = arith.select %63, %85, %90 : vector<2x256xi1>, vector<2x256xf32>
    %92 = vector.extract_strided_slice %91 {offsets = [0, 64], sizes = [2, 64], strides = [1, 1]} : vector<2x256xf32> to vector<2x64xf32>
    %93 = arith.mulf %92, %81 : vector<2x64xf32>
    %94 = vector.extract_strided_slice %91 {offsets = [0, 0], sizes = [2, 64], strides = [1, 1]} : vector<2x256xf32> to vector<2x64xf32>
    %95 = vector.extract_strided_slice %91 {offsets = [0, 128], sizes = [2, 64], strides = [1, 1]} : vector<2x256xf32> to vector<2x64xf32>
    %96 = arith.mulf %94, %95 : vector<2x64xf32>
    %97 = arith.addf %93, %96 : vector<2x64xf32>
    %98 = vector.extract_strided_slice %91 {offsets = [0, 192], sizes = [2, 64], strides = [1, 1]} : vector<2x256xf32> to vector<2x64xf32>
    %99 = math.tanh %97 : vector<2x64xf32>
    %100 = arith.mulf %98, %99 : vector<2x64xf32>
    %101 = vector.extract_strided_slice %51 {offsets = [4, 0], sizes = [2, 256], strides = [1, 1]} : vector<18x256xf32> to vector<2x256xf32>
    %cst_23 = arith.constant dense<0.000000e+00> : vector<2x256xf32>
    %102 = tpu.matmul %100, %31, %cst_23 {dimension_numbers = #tpu.dot_dimension_numbers<[1], [0], [0], [1], [0, 0, 1, 1], [], []>} : vector<2x64xf32>, vector<64x256xf32>, vector<2x256xf32> -> vector<2x256xf32>
    %103 = arith.addf %101, %102 : vector<2x256xf32>
    %104 = math.tanh %103 : vector<2x256xf32>
    %105 = arith.negf %103 : vector<2x256xf32>
    %106 = math.exp %105 : vector<2x256xf32>
    %cst_24 = arith.constant 1.000000e+00 : f32
    %107 = vector.broadcast %cst_24 : f32 to vector<2x256xf32>
    %108 = arith.addf %107, %106 : vector<2x256xf32>
    %109 = arith.divf %107, %108 : vector<2x256xf32>
    %110 = arith.select %63, %104, %109 : vector<2x256xi1>, vector<2x256xf32>
    %111 = vector.extract_strided_slice %110 {offsets = [0, 64], sizes = [2, 64], strides = [1, 1]} : vector<2x256xf32> to vector<2x64xf32>
    %112 = arith.mulf %111, %97 : vector<2x64xf32>
    %113 = vector.extract_strided_slice %110 {offsets = [0, 0], sizes = [2, 64], strides = [1, 1]} : vector<2x256xf32> to vector<2x64xf32>
    %114 = vector.extract_strided_slice %110 {offsets = [0, 128], sizes = [2, 64], strides = [1, 1]} : vector<2x256xf32> to vector<2x64xf32>
    %115 = arith.mulf %113, %114 : vector<2x64xf32>
    %116 = arith.addf %112, %115 : vector<2x64xf32>
    %117 = vector.extract_strided_slice %110 {offsets = [0, 192], sizes = [2, 64], strides = [1, 1]} : vector<2x256xf32> to vector<2x64xf32>
    %118 = math.tanh %116 : vector<2x64xf32>
    %119 = arith.mulf %117, %118 : vector<2x64xf32>
    %120 = vector.extract_strided_slice %51 {offsets = [6, 0], sizes = [2, 256], strides = [1, 1]} : vector<18x256xf32> to vector<2x256xf32>
    %cst_25 = arith.constant dense<0.000000e+00> : vector<2x256xf32>
    %121 = tpu.matmul %119, %31, %cst_25 {dimension_numbers = #tpu.dot_dimension_numbers<[1], [0], [0], [1], [0, 0, 1, 1], [], []>} : vector<2x64xf32>, vector<64x256xf32>, vector<2x256xf32> -> vector<2x256xf32>
    %122 = arith.addf %120, %121 : vector<2x256xf32>
    %123 = math.tanh %122 : vector<2x256xf32>
    %124 = arith.negf %122 : vector<2x256xf32>
    %125 = math.exp %124 : vector<2x256xf32>
    %cst_26 = arith.constant 1.000000e+00 : f32
    %126 = vector.broadcast %cst_26 : f32 to vector<2x256xf32>
    %127 = arith.addf %126, %125 : vector<2x256xf32>
    %128 = arith.divf %126, %127 : vector<2x256xf32>
    %129 = arith.select %63, %123, %128 : vector<2x256xi1>, vector<2x256xf32>
    %130 = vector.extract_strided_slice %129 {offsets = [0, 64], sizes = [2, 64], strides = [1, 1]} : vector<2x256xf32> to vector<2x64xf32>
    %131 = arith.mulf %130, %116 : vector<2x64xf32>
    %132 = vector.extract_strided_slice %129 {offsets = [0, 0], sizes = [2, 64], strides = [1, 1]} : vector<2x256xf32> to vector<2x64xf32>
    %133 = vector.extract_strided_slice %129 {offsets = [0, 128], sizes = [2, 64], strides = [1, 1]} : vector<2x256xf32> to vector<2x64xf32>
    %134 = arith.mulf %132, %133 : vector<2x64xf32>
    %135 = arith.addf %131, %134 : vector<2x64xf32>
    %136 = vector.extract_strided_slice %129 {offsets = [0, 192], sizes = [2, 64], strides = [1, 1]} : vector<2x256xf32> to vector<2x64xf32>
    %137 = math.tanh %135 : vector<2x64xf32>
    %138 = arith.mulf %136, %137 : vector<2x64xf32>
    %139 = vector.extract_strided_slice %51 {offsets = [8, 0], sizes = [2, 256], strides = [1, 1]} : vector<18x256xf32> to vector<2x256xf32>
    %cst_27 = arith.constant dense<0.000000e+00> : vector<2x256xf32>
    %140 = tpu.matmul %138, %31, %cst_27 {dimension_numbers = #tpu.dot_dimension_numbers<[1], [0], [0], [1], [0, 0, 1, 1], [], []>} : vector<2x64xf32>, vector<64x256xf32>, vector<2x256xf32> -> vector<2x256xf32>
    %141 = arith.addf %139, %140 : vector<2x256xf32>
    %142 = math.tanh %141 : vector<2x256xf32>
    %143 = arith.negf %141 : vector<2x256xf32>
    %144 = math.exp %143 : vector<2x256xf32>
    %cst_28 = arith.constant 1.000000e+00 : f32
    %145 = vector.broadcast %cst_28 : f32 to vector<2x256xf32>
    %146 = arith.addf %145, %144 : vector<2x256xf32>
    %147 = arith.divf %145, %146 : vector<2x256xf32>
    %148 = arith.select %63, %142, %147 : vector<2x256xi1>, vector<2x256xf32>
    %149 = vector.extract_strided_slice %148 {offsets = [0, 64], sizes = [2, 64], strides = [1, 1]} : vector<2x256xf32> to vector<2x64xf32>
    %150 = arith.mulf %149, %135 : vector<2x64xf32>
    %151 = vector.extract_strided_slice %148 {offsets = [0, 0], sizes = [2, 64], strides = [1, 1]} : vector<2x256xf32> to vector<2x64xf32>
    %152 = vector.extract_strided_slice %148 {offsets = [0, 128], sizes = [2, 64], strides = [1, 1]} : vector<2x256xf32> to vector<2x64xf32>
    %153 = arith.mulf %151, %152 : vector<2x64xf32>
    %154 = arith.addf %150, %153 : vector<2x64xf32>
    %155 = vector.extract_strided_slice %148 {offsets = [0, 192], sizes = [2, 64], strides = [1, 1]} : vector<2x256xf32> to vector<2x64xf32>
    %156 = math.tanh %154 : vector<2x64xf32>
    %157 = arith.mulf %155, %156 : vector<2x64xf32>
    %158 = vector.extract_strided_slice %51 {offsets = [10, 0], sizes = [2, 256], strides = [1, 1]} : vector<18x256xf32> to vector<2x256xf32>
    %cst_29 = arith.constant dense<0.000000e+00> : vector<2x256xf32>
    %159 = tpu.matmul %157, %31, %cst_29 {dimension_numbers = #tpu.dot_dimension_numbers<[1], [0], [0], [1], [0, 0, 1, 1], [], []>} : vector<2x64xf32>, vector<64x256xf32>, vector<2x256xf32> -> vector<2x256xf32>
    %160 = arith.addf %158, %159 : vector<2x256xf32>
    %161 = math.tanh %160 : vector<2x256xf32>
    %162 = arith.negf %160 : vector<2x256xf32>
    %163 = math.exp %162 : vector<2x256xf32>
    %cst_30 = arith.constant 1.000000e+00 : f32
    %164 = vector.broadcast %cst_30 : f32 to vector<2x256xf32>
    %165 = arith.addf %164, %163 : vector<2x256xf32>
    %166 = arith.divf %164, %165 : vector<2x256xf32>
    %167 = arith.select %63, %161, %166 : vector<2x256xi1>, vector<2x256xf32>
    %168 = vector.extract_strided_slice %167 {offsets = [0, 64], sizes = [2, 64], strides = [1, 1]} : vector<2x256xf32> to vector<2x64xf32>
    %169 = arith.mulf %168, %154 : vector<2x64xf32>
    %170 = vector.extract_strided_slice %167 {offsets = [0, 0], sizes = [2, 64], strides = [1, 1]} : vector<2x256xf32> to vector<2x64xf32>
    %171 = vector.extract_strided_slice %167 {offsets = [0, 128], sizes = [2, 64], strides = [1, 1]} : vector<2x256xf32> to vector<2x64xf32>
    %172 = arith.mulf %170, %171 : vector<2x64xf32>
    %173 = arith.addf %169, %172 : vector<2x64xf32>
    %174 = vector.extract_strided_slice %167 {offsets = [0, 192], sizes = [2, 64], strides = [1, 1]} : vector<2x256xf32> to vector<2x64xf32>
    %175 = math.tanh %173 : vector<2x64xf32>
    %176 = arith.mulf %174, %175 : vector<2x64xf32>
    %177 = vector.extract_strided_slice %51 {offsets = [12, 0], sizes = [2, 256], strides = [1, 1]} : vector<18x256xf32> to vector<2x256xf32>
    %cst_31 = arith.constant dense<0.000000e+00> : vector<2x256xf32>
    %178 = tpu.matmul %176, %31, %cst_31 {dimension_numbers = #tpu.dot_dimension_numbers<[1], [0], [0], [1], [0, 0, 1, 1], [], []>} : vector<2x64xf32>, vector<64x256xf32>, vector<2x256xf32> -> vector<2x256xf32>
    %179 = arith.addf %177, %178 : vector<2x256xf32>
    %180 = math.tanh %179 : vector<2x256xf32>
    %181 = arith.negf %179 : vector<2x256xf32>
    %182 = math.exp %181 : vector<2x256xf32>
    %cst_32 = arith.constant 1.000000e+00 : f32
    %183 = vector.broadcast %cst_32 : f32 to vector<2x256xf32>
    %184 = arith.addf %183, %182 : vector<2x256xf32>
    %185 = arith.divf %183, %184 : vector<2x256xf32>
    %186 = arith.select %63, %180, %185 : vector<2x256xi1>, vector<2x256xf32>
    %187 = vector.extract_strided_slice %186 {offsets = [0, 64], sizes = [2, 64], strides = [1, 1]} : vector<2x256xf32> to vector<2x64xf32>
    %188 = arith.mulf %187, %173 : vector<2x64xf32>
    %189 = vector.extract_strided_slice %186 {offsets = [0, 0], sizes = [2, 64], strides = [1, 1]} : vector<2x256xf32> to vector<2x64xf32>
    %190 = vector.extract_strided_slice %186 {offsets = [0, 128], sizes = [2, 64], strides = [1, 1]} : vector<2x256xf32> to vector<2x64xf32>
    %191 = arith.mulf %189, %190 : vector<2x64xf32>
    %192 = arith.addf %188, %191 : vector<2x64xf32>
    %193 = vector.extract_strided_slice %186 {offsets = [0, 192], sizes = [2, 64], strides = [1, 1]} : vector<2x256xf32> to vector<2x64xf32>
    %194 = math.tanh %192 : vector<2x64xf32>
    %195 = arith.mulf %193, %194 : vector<2x64xf32>
    %196 = vector.extract_strided_slice %51 {offsets = [14, 0], sizes = [2, 256], strides = [1, 1]} : vector<18x256xf32> to vector<2x256xf32>
    %cst_33 = arith.constant dense<0.000000e+00> : vector<2x256xf32>
    %197 = tpu.matmul %195, %31, %cst_33 {dimension_numbers = #tpu.dot_dimension_numbers<[1], [0], [0], [1], [0, 0, 1, 1], [], []>} : vector<2x64xf32>, vector<64x256xf32>, vector<2x256xf32> -> vector<2x256xf32>
    %198 = arith.addf %196, %197 : vector<2x256xf32>
    %199 = math.tanh %198 : vector<2x256xf32>
    %200 = arith.negf %198 : vector<2x256xf32>
    %201 = math.exp %200 : vector<2x256xf32>
    %cst_34 = arith.constant 1.000000e+00 : f32
    %202 = vector.broadcast %cst_34 : f32 to vector<2x256xf32>
    %203 = arith.addf %202, %201 : vector<2x256xf32>
    %204 = arith.divf %202, %203 : vector<2x256xf32>
    %205 = arith.select %63, %199, %204 : vector<2x256xi1>, vector<2x256xf32>
    %206 = vector.extract_strided_slice %205 {offsets = [0, 64], sizes = [2, 64], strides = [1, 1]} : vector<2x256xf32> to vector<2x64xf32>
    %207 = arith.mulf %206, %192 : vector<2x64xf32>
    %208 = vector.extract_strided_slice %205 {offsets = [0, 0], sizes = [2, 64], strides = [1, 1]} : vector<2x256xf32> to vector<2x64xf32>
    %209 = vector.extract_strided_slice %205 {offsets = [0, 128], sizes = [2, 64], strides = [1, 1]} : vector<2x256xf32> to vector<2x64xf32>
    %210 = arith.mulf %208, %209 : vector<2x64xf32>
    %211 = arith.addf %207, %210 : vector<2x64xf32>
    %212 = vector.extract_strided_slice %205 {offsets = [0, 192], sizes = [2, 64], strides = [1, 1]} : vector<2x256xf32> to vector<2x64xf32>
    %213 = math.tanh %211 : vector<2x64xf32>
    %214 = arith.mulf %212, %213 : vector<2x64xf32>
    %215 = vector.extract_strided_slice %51 {offsets = [16, 0], sizes = [2, 256], strides = [1, 1]} : vector<18x256xf32> to vector<2x256xf32>
    %cst_35 = arith.constant dense<0.000000e+00> : vector<2x256xf32>
    %216 = tpu.matmul %214, %31, %cst_35 {dimension_numbers = #tpu.dot_dimension_numbers<[1], [0], [0], [1], [0, 0, 1, 1], [], []>} : vector<2x64xf32>, vector<64x256xf32>, vector<2x256xf32> -> vector<2x256xf32>
    %217 = arith.addf %215, %216 : vector<2x256xf32>
    %218 = math.tanh %217 : vector<2x256xf32>
    %219 = arith.negf %217 : vector<2x256xf32>
    %220 = math.exp %219 : vector<2x256xf32>
    %cst_36 = arith.constant 1.000000e+00 : f32
    %221 = vector.broadcast %cst_36 : f32 to vector<2x256xf32>
    %222 = arith.addf %221, %220 : vector<2x256xf32>
    %223 = arith.divf %221, %222 : vector<2x256xf32>
    %224 = arith.select %63, %218, %223 : vector<2x256xi1>, vector<2x256xf32>
    %225 = vector.extract_strided_slice %224 {offsets = [0, 64], sizes = [2, 64], strides = [1, 1]} : vector<2x256xf32> to vector<2x64xf32>
    %226 = arith.mulf %225, %211 : vector<2x64xf32>
    %227 = vector.extract_strided_slice %224 {offsets = [0, 0], sizes = [2, 64], strides = [1, 1]} : vector<2x256xf32> to vector<2x64xf32>
    %228 = vector.extract_strided_slice %224 {offsets = [0, 128], sizes = [2, 64], strides = [1, 1]} : vector<2x256xf32> to vector<2x64xf32>
    %229 = arith.mulf %227, %228 : vector<2x64xf32>
    %230 = arith.addf %226, %229 : vector<2x64xf32>
    %231 = vector.extract_strided_slice %224 {offsets = [0, 192], sizes = [2, 64], strides = [1, 1]} : vector<2x256xf32> to vector<2x64xf32>
    %232 = math.tanh %230 : vector<2x64xf32>
    %233 = arith.mulf %231, %232 : vector<2x64xf32>
    %234 = vector.extract_strided_slice %233 {offsets = [0, 32], sizes = [2, 32], strides = [1, 1]} : vector<2x64xf32> to vector<2x32xf32>
    %c0_37 = arith.constant 0 : index
    %c0_38 = arith.constant 0 : index
    %235 = vector.load %arg8[%c0_37, %c0_38] : memref<32x64xf32, #tpu.memory_space<vmem>>, vector<32x64xf32>
    %cst_39 = arith.constant dense<0.000000e+00> : vector<2x64xf32>
    %236 = tpu.matmul %234, %235, %cst_39 {dimension_numbers = #tpu.dot_dimension_numbers<[1], [0], [0], [1], [0, 0, 1, 1], [], []>} : vector<2x32xf32>, vector<32x64xf32>, vector<2x64xf32> -> vector<2x64xf32>
    %c0_40 = arith.constant 0 : index
    %c0_41 = arith.constant 0 : index
    %237 = vector.load %arg9[%c0_40, %c0_41] : memref<1x64xf32, #tpu.memory_space<vmem>>, vector<1x64xf32>
    %238 = vector.broadcast %237 : vector<1x64xf32> to vector<2x64xf32>
    %239 = arith.addf %236, %238 : vector<2x64xf32>
    %c0_42 = arith.constant 0 : index
    %c0_43 = arith.constant 0 : index
    %240 = vector.load %arg10[%c0_42, %c0_43] : memref<2x64xf32, #tpu.memory_space<vmem>>, vector<2x64xf32>
    tpu.vector_store %arg10[%c0_42, %c0_43], %239 {strides = array<i32>} : memref<2x64xf32, #tpu.memory_space<vmem>>, vector<2x64xf32>,
    return
  }
}

</mosaic_0001>

<llo_original>
// kernel: lstm_model_forward.1
$region0: #{lstm_model_forward.1}
  #allocation0 [shape = 'u32[]', space=smem, size = 0x4, offset = 0x4, fixed_abs, tag = 'smem constant byte address 0x4 - core index']
  #allocation1 [shape = 'u32[72,128]{1,0:T(1,128)}', space=vmem, size = 0x9000, scoped, tag = 'internal scratch']
  %s0 = inlined_call_operand.vmem [shape: s32[16,1], index: 0, kind: input, shape index: {}]
  %s1 = inlined_call_operand.vmem [shape: f32[64,32], index: 1, kind: input, shape index: {}]
  %s2 = inlined_call_operand.vmem [shape: f32[32,128], index: 2, kind: input, shape index: {}]
  %s3 = inlined_call_operand.vmem [shape: f32[32,128], index: 3, kind: input, shape index: {}]
  %s4 = inlined_call_operand.vmem [shape: f32[1,128], index: 4, kind: input, shape index: {}]
  %s5 = inlined_call_operand.vmem [shape: f32[32,128], index: 5, kind: input, shape index: {}]
  %s6 = inlined_call_operand.hbm [shape: f32[32,128], index: 6, kind: input, shape index: {}]
  %s7 = inlined_call_operand.vmem [shape: f32[1,128], index: 7, kind: input, shape index: {}]
  %s8 = inlined_call_operand.hbm [shape: f32[32,64], index: 8, kind: input, shape index: {}]
  %s9 = inlined_call_operand.vmem [shape: f32[1,64], index: 9, kind: input, shape index: {}]
  %s10 = inlined_call_operand.hbm [shape: f32[2,64], index: 10, kind: output, shape index: {}]
  %s11 = sld [smem:[#allocation0]]
  $region58: #{lstm_model_forward.1} parent=0
    _
  %s13 = ssub.s32 1, %s11
  %s14 = scalar_select 0, %s13, %s11
  $region1: #{lstm_model_forward.1} parent=0
    #allocation2 [shape = 'u8[16384]{0}', space=vmem, size = 0x4000, scoped, tag = 'input window, operand 6, single buffered']
    #allocation3 [shape = 's32[1]{0}', space=sflag, size = 0x4, scoped, tag = 'scoped memory for lstm_model_forward.1']
    #allocation4 [shape = 's32[1]{0}', space=sflag, size = 0x4, scoped, tag = 'scoped memory for lstm_model_forward.1']
    #allocation5 [shape = 'u8[16384]{0}', space=vmem, size = 0x4000, scoped, tag = 'input window, operand 8, single buffered']
    #allocation6 [shape = 's32[1]{0}', space=sflag, size = 0x4, scoped, tag = 'scoped memory for lstm_model_forward.1']
    #allocation7 [shape = 'u8[1024]{0}', space=vmem, size = 0x400, scoped, tag = 'output window, operand 0, single buffered']
    %15 = vsyncpa [#allocation3], 0
    %16 = vsyncpa [#allocation6], 0
    %17 = vsyncpa [#allocation4], 0
    // Predicated region
    $region2: #{lstm_model_forward.1} parent=1 // pred_check
      _
    $region3: #{lstm_model_forward.1} parent=1 // pred_check_branch
      %19 = sbr.rel (0) target = $region5
    $region4: #{lstm_model_forward.1} parent=1 // pred_region
      _
    $region5: #{lstm_model_forward.1} parent=1 // pred_fallthru
      _
    // Predicated region
    $region6: #{lstm_model_forward.1} parent=1 // pred_check
      _
    $region7: #{lstm_model_forward.1} parent=1 // pred_check_branch
      %21 = sbr.rel (0) target = $region9
    $region8: #{lstm_model_forward.1} parent=1 // pred_region
      _
    $region9: #{lstm_model_forward.1} parent=1 // pred_fallthru
      _
    // Predicated region
    $region10: #{lstm_model_forward.1} parent=1 // pred_check
      _
    $region11: #{lstm_model_forward.1} parent=1 // pred_check_branch
      %23 = sbr.rel (0) target = $region13
    $region12: #{lstm_model_forward.1} parent=1 // pred_region
      _
    $region13: #{lstm_model_forward.1} parent=1 // pred_fallthru
      _
    // Predicated region
    $region14: #{lstm_model_forward.1} parent=1 // pred_check
      _
    $region15: #{lstm_model_forward.1} parent=1 // pred_check_branch
      %25 = sbr.rel (0) target = $region17
    $region16: #{lstm_model_forward.1} parent=1 // pred_region
      _
    $region17: #{lstm_model_forward.1} parent=1 // pred_fallthru
      _
    // Predicated region
    $region18: #{lstm_model_forward.1} parent=1 // pred_check
      _
    $region19: #{lstm_model_forward.1} parent=1 // pred_check_branch
      %27 = sbr.rel (0) target = $region21
    $region20: #{lstm_model_forward.1} parent=1 // pred_region
      _
    $region21: #{lstm_model_forward.1} parent=1 // pred_fallthru
      _
    // Predicated region
    $region22: #{lstm_model_forward.1} parent=1 // pred_check
      _
    $region23: #{lstm_model_forward.1} parent=1 // pred_check_branch
      %29 = sbr.rel (0) target = $region25
    $region24: #{lstm_model_forward.1} parent=1 // pred_region
      _
    $region25: #{lstm_model_forward.1} parent=1 // pred_fallthru
      _
    // Predicated region
    $region26: #{lstm_model_forward.1} parent=1 // pred_check
      _
    $region27: #{lstm_model_forward.1} parent=1 // pred_check_branch
      %31 = sbr.rel (0) target = $region29
    $region28: #{lstm_model_forward.1} parent=1 // pred_region
      %33 = vsyncadd [#allocation3], 0
      %s34 = sshll.u32 %s6, 4
      %s35 = int_to_ptr.hbm [resolvable:$true] %s34
      %s36 = sshll.u32 [#allocation2], 4
      %s37 = int_to_ptr.vmem [resolvable:$true] %s36
      %42 = dma.hbm_to_vmem [thread:$0]  %s35, 512, %s37, [#allocation3], 128, 128, 8
    $region29: #{lstm_model_forward.1} parent=1 // pred_fallthru
      _
    // Predicated region
    $region30: #{lstm_model_forward.1} parent=1 // pred_check
      _
    $region31: #{lstm_model_forward.1} parent=1 // pred_check_branch
      %44 = sbr.rel (0) target = $region33
    $region32: #{lstm_model_forward.1} parent=1 // pred_region
      _
    $region33: #{lstm_model_forward.1} parent=1 // pred_fallthru
      _
    // Predicated region
    $region34: #{lstm_model_forward.1} parent=1 // pred_check
      _
    $region35: #{lstm_model_forward.1} parent=1 // pred_check_branch
      %46 = sbr.rel (0) target = $region37
    $region36: #{lstm_model_forward.1} parent=1 // pred_region
      %48 = vsyncadd [#allocation6], 0
      %s49 = sshll.u32 %s8, 4
      %s50 = int_to_ptr.hbm [resolvable:$true] %s49
      %s51 = sshll.u32 [#allocation5], 4
      %s52 = int_to_ptr.vmem [resolvable:$true] %s51
      %57 = dma.hbm_to_vmem [thread:$0]  %s50, 512, %s52, [#allocation6], 128, 128, 8
    $region37: #{lstm_model_forward.1} parent=1 // pred_fallthru
      _
    // Predicated region
    $region38: #{lstm_model_forward.1} parent=1 // pred_check
      _
    $region39: #{lstm_model_forward.1} parent=1 // pred_check_branch
      %59 = sbr.rel (0) target = $region41
    $region40: #{lstm_model_forward.1} parent=1 // pred_region
      _
    $region41: #{lstm_model_forward.1} parent=1 // pred_fallthru
      _
    // Predicated region
    $region42: #{lstm_model_forward.1} parent=1 // pred_check
      _
    $region43: #{lstm_model_forward.1} parent=1 // pred_check_branch
      %61 = sbr.rel (0) target = $region45
    $region44: #{lstm_model_forward.1} parent=1 // pred_region
      %63 = dma.done [#allocation3], 512
    $region45: #{lstm_model_forward.1} parent=1 // pred_fallthru
      _
    // Predicated region
    $region46: #{lstm_model_forward.1} parent=1 // pred_check
      _
    $region47: #{lstm_model_forward.1} parent=1 // pred_check_branch
      %65 = sbr.rel (0) target = $region49
    $region48: #{lstm_model_forward.1} parent=1 // pred_region
      %67 = dma.done [#allocation6], 512
    $region49: #{lstm_model_forward.1} parent=1 // pred_fallthru
      _
    %v68 = vlaneseq
    %v69 = vand.u32 %v68, 127
    %v70 = vld [vmem:[%s0] sm:$0xff]
    %v71 = vld [vmem:[%s0 + $0x8] sm:$0xff]
    %72 = vset.pattern.permute.xlu0 0
    %73 = vperm.xlu0 %72, %v70
    %v74 = vpop.permute.xlu0 %73
    %75 = vset.pattern.permute.xlu0 0
    %76 = vperm.xlu0 %75, %v71
    %v77 = vpop.permute.xlu0 %76
    %vm78 = vcmp.eq.s32.totalorder %v69, %v74
    %vm79 = vcmp.eq.s32.totalorder %v69, %v77
    %v80 = vsel %vm78, 1, 0
    %v81 = vsel %vm79, 1, 0
    %v82 = vcvt.s32.f32 %v80
    %v83 = vcvt.s32.f32 %v81
    %v84 = vld [vmem:[%s1] sm:$0xff]
    %v85 = vld [vmem:[%s1 + $0x8] sm:$0xff]
    %v86 = vld [vmem:[%s1 + $0x10] sm:$0xff]
    %v87 = vld [vmem:[%s1 + $0x18] sm:$0xff]
    %v88 = vld [vmem:[%s1 + $0x20] sm:$0xff]
    %v89 = vld [vmem:[%s1 + $0x28] sm:$0xff]
    %v90 = vld [vmem:[%s1 + $0x30] sm:$0xff]
    %v91 = vld [vmem:[%s1 + $0x38] sm:$0xff]
    %vm92 = vcmask 523264
    %v94 = vsel %vm92, %v82, 0
    %v97 = vsel %vm92, %v83, 0
    %99 = vmatpush.msra.mxu0 0.0
    %100 = vmatpush.msra.mxu0 0.0
    %101 = vmatpush.msra.mxu0 0.0
    %102 = vmatpush.msra.mxu0 0.0
    %103 = vmatpush.msra.mxu0 0.0
    %104 = vmatpush.msra.mxu0 0.0
    %105 = vmatpush.msra.mxu0 0.0
    %106 = vmatpush.msra.mxu0 0.0
    %107 = vmatpush.msra.mxu0 %v91
    %108 = vmatpush.msra.mxu0 %v90
    %109 = vmatpush.msra.mxu0 %v89
    %110 = vmatpush.msra.mxu0 %v88
    %111 = vmatpush.msra.mxu0 %v87
    %112 = vmatpush.msra.mxu0 %v86
    %113 = vmatpush.msra.mxu0 %v85
    %114 = vmatpush.msra.mxu0 %v84
    %115 = vmatmul.f32.gmra.mxu0 %v94
    %v116 = vpop.f32.mrf.mxu0
    %v117 = vadd.f32 0.0, %v116
    %118 = vmatmul.f32.gmra.mxu0 %v97
    %v119 = vpop.f32.mrf.mxu0
    %v120 = vadd.f32 0.0, %v119
    %121 = vdwg.mxu0
    %v122 = vld [vmem:[%s2] sm:$0xff]
    %v123 = vld [vmem:[%s2 + $0x8] sm:$0xff]
    %v124 = vld [vmem:[%s2 + $0x10] sm:$0xff]
    %v125 = vld [vmem:[%s2 + $0x18] sm:$0xff]
    %v126 = vld [vmem:[%s4] sm:$0x1]
    %v128 = vperm.slane %v126, 0
    %vm130 = vcmask 261120
    %v132 = vsel %vm130, %v117, 0
    %v135 = vsel %vm130, %v120, 0
    %137 = vmatpush.msra.mxu0 0.0
    %138 = vmatpush.msra.mxu0 0.0
    %139 = vmatpush.msra.mxu0 0.0
    %140 = vmatpush.msra.mxu0 0.0
    %141 = vmatpush.msra.mxu0 0.0
    %142 = vmatpush.msra.mxu0 0.0
    %143 = vmatpush.msra.mxu0 0.0
    %144 = vmatpush.msra.mxu0 0.0
    %145 = vmatpush.msra.mxu0 0.0
    %146 = vmatpush.msra.mxu0 0.0
    %147 = vmatpush.msra.mxu0 0.0
    %148 = vmatpush.msra.mxu0 0.0
    %149 = vmatpush.msra.mxu0 %v125
    %150 = vmatpush.msra.mxu0 %v124
    %151 = vmatpush.msra.mxu0 %v123
    %152 = vmatpush.msra.mxu0 %v122
    %153 = vmatmul.f32.gmra.mxu0 %v132
    %v154 = vpop.f32.mrf.mxu0
    %v155 = vadd.f32 %v128, %v154
    %156 = vmatmul.f32.gmra.mxu0 %v135
    %v157 = vpop.f32.mrf.mxu0
    %v158 = vadd.f32 %v128, %v157
    %159 = vdwg.mxu0
    %v160 = vld [vmem:[%s3] sm:$0xff]
    %v161 = vld [vmem:[%s3 + $0x8] sm:$0xff]
    %v162 = vld [vmem:[%s3 + $0x10] sm:$0xff]
    %v163 = vld [vmem:[%s3 + $0x18] sm:$0xff]
    %v164 = vld [vmem:[#allocation2] sm:$0xff]
    %v165 = vld [vmem:[#allocation2 + $0x8] sm:$0xff]
    %v166 = vld [vmem:[#allocation2 + $0x10] sm:$0xff]
    %v167 = vld [vmem:[#allocation2 + $0x18] sm:$0xff]
    %v168 = vld [vmem:[%s5] sm:$0xff]
    %v169 = vld [vmem:[%s5 + $0x8] sm:$0xff]
    %v170 = vld [vmem:[%s5 + $0x10] sm:$0xff]
    %v171 = vld [vmem:[%s5 + $0x18] sm:$0xff]
    %176 = vrot.lane.b32.xlu0 %v168, 32
    %v177 = vpop.permute.xlu0 %176
    %178 = vrot.lane.b32.xlu0 %v169, 32
    %v179 = vpop.permute.xlu0 %178
    %180 = vrot.lane.b32.xlu0 %v170, 32
    %v181 = vpop.permute.xlu0 %180
    %182 = vrot.lane.b32.xlu0 %v171, 32
    %v183 = vpop.permute.xlu0 %182
    %192 = vrot.lane.b32.xlu0 %v160, 32
    %v193 = vpop.permute.xlu0 %192
    %194 = vrot.lane.b32.xlu0 %v161, 32
    %v195 = vpop.permute.xlu0 %194
    %196 = vrot.lane.b32.xlu0 %v162, 32
    %v197 = vpop.permute.xlu0 %196
    %198 = vrot.lane.b32.xlu0 %v163, 32
    %v199 = vpop.permute.xlu0 %198
    %204 = vrot.lane.b32.xlu0 %v168, 64
    %v205 = vpop.permute.xlu0 %204
    %206 = vrot.lane.b32.xlu0 %v169, 64
    %v207 = vpop.permute.xlu0 %206
    %208 = vrot.lane.b32.xlu0 %v170, 64
    %v209 = vpop.permute.xlu0 %208
    %210 = vrot.lane.b32.xlu0 %v171, 64
    %v211 = vpop.permute.xlu0 %210
    %216 = vrot.lane.b32.xlu0 %v160, 64
    %v217 = vpop.permute.xlu0 %216
    %218 = vrot.lane.b32.xlu0 %v161, 64
    %v219 = vpop.permute.xlu0 %218
    %220 = vrot.lane.b32.xlu0 %v162, 64
    %v221 = vpop.permute.xlu0 %220
    %222 = vrot.lane.b32.xlu0 %v163, 64
    %v223 = vpop.permute.xlu0 %222
    %228 = vrot.lane.b32.xlu0 %v168, 96
    %v229 = vpop.permute.xlu0 %228
    %230 = vrot.lane.b32.xlu0 %v169, 96
    %v231 = vpop.permute.xlu0 %230
    %232 = vrot.lane.b32.xlu0 %v170, 96
    %v233 = vpop.permute.xlu0 %232
    %234 = vrot.lane.b32.xlu0 %v171, 96
    %v235 = vpop.permute.xlu0 %234
    %240 = vrot.lane.b32.xlu0 %v160, 96
    %v241 = vpop.permute.xlu0 %240
    %242 = vrot.lane.b32.xlu0 %v161, 96
    %v243 = vpop.permute.xlu0 %242
    %244 = vrot.lane.b32.xlu0 %v162, 96
    %v245 = vpop.permute.xlu0 %244
    %246 = vrot.lane.b32.xlu0 %v163, 96
    %v247 = vpop.permute.xlu0 %246
    %v252 = vsel %vm130, %v160, %v177
    %v253 = vsel %vm130, %v161, %v179
    %v254 = vsel %vm130, %v162, %v181
    %v255 = vsel %vm130, %v163, %v183
    %v256 = vsel %vm92, %v252, %v193
    %v257 = vsel %vm92, %v253, %v195
    %v258 = vsel %vm92, %v254, %v197
    %v259 = vsel %vm92, %v255, %v199
    %vm260 = vcmask 785408
    %v261 = vsel %vm260, %v256, %v205
    %v262 = vsel %vm260, %v257, %v207
    %v263 = vsel %vm260, %v258, %v209
    %v264 = vsel %vm260, %v259, %v211
    %v265 = vsel %vm130, %v217, %v229
    %v266 = vsel %vm130, %v219, %v231
    %v267 = vsel %vm130, %v221, %v233
    %v268 = vsel %vm130, %v223, %v235
    %v269 = vsel %vm92, %v265, %v241
    %v270 = vsel %vm92, %v266, %v243
    %v271 = vsel %vm92, %v267, %v245
    %v272 = vsel %vm92, %v268, %v247
    %v273 = vsel %vm260, %v269, %v168
    %v274 = vsel %vm260, %v270, %v169
    %v275 = vsel %vm260, %v271, %v170
    %v276 = vsel %vm260, %v272, %v171
    %281 = vrot.lane.b32.xlu0 %v164, 32
    %v282 = vpop.permute.xlu0 %281
    %283 = vrot.lane.b32.xlu0 %v165, 32
    %v284 = vpop.permute.xlu0 %283
    %285 = vrot.lane.b32.xlu0 %v166, 32
    %v286 = vpop.permute.xlu0 %285
    %287 = vrot.lane.b32.xlu0 %v167, 32
    %v288 = vpop.permute.xlu0 %287
    %293 = vrot.lane.b32.xlu0 %v164, 64
    %v294 = vpop.permute.xlu0 %293
    %295 = vrot.lane.b32.xlu0 %v165, 64
    %v296 = vpop.permute.xlu0 %295
    %297 = vrot.lane.b32.xlu0 %v166, 64
    %v298 = vpop.permute.xlu0 %297
    %299 = vrot.lane.b32.xlu0 %v167, 64
    %v300 = vpop.permute.xlu0 %299
    %305 = vrot.lane.b32.xlu0 %v164, 96
    %v306 = vpop.permute.xlu0 %305
    %307 = vrot.lane.b32.xlu0 %v165, 96
    %v308 = vpop.permute.xlu0 %307
    %309 = vrot.lane.b32.xlu0 %v166, 96
    %v310 = vpop.permute.xlu0 %309
    %311 = vrot.lane.b32.xlu0 %v167, 96
    %v312 = vpop.permute.xlu0 %311
    %v317 = vsel %vm130, 0.0, %v282
    %v318 = vsel %vm130, 0.0, %v284
    %v319 = vsel %vm130, 0.0, %v286
    %v320 = vsel %vm130, 0.0, %v288
    %v321 = vsel %vm92, %v317, 0.0
    %v322 = vsel %vm92, %v318, 0.0
    %v323 = vsel %vm92, %v319, 0.0
    %v324 = vsel %vm92, %v320, 0.0
    %v325 = vsel %vm260, %v321, %v294
    %v326 = vsel %vm260, %v322, %v296
    %v327 = vsel %vm260, %v323, %v298
    %v328 = vsel %vm260, %v324, %v300
    %v329 = vsel %vm130, 0.0, %v306
    %v330 = vsel %vm130, 0.0, %v308
    %v331 = vsel %vm130, 0.0, %v310
    %v332 = vsel %vm130, 0.0, %v312
    %v333 = vsel %vm92, %v329, 0.0
    %v334 = vsel %vm92, %v330, 0.0
    %v335 = vsel %vm92, %v331, 0.0
    %v336 = vsel %vm92, %v332, 0.0
    %v337 = vsel %vm260, %v333, %v164
    %v338 = vsel %vm260, %v334, %v165
    %v339 = vsel %vm260, %v335, %v166
    %v340 = vsel %vm260, %v336, %v167
    %v341 = vld [vmem:[%s7] sm:$0x1]
    %v343 = vperm.slane %v341, 0
    %345 = vrot.lane.b32.xlu0 %v343, 32
    %v346 = vpop.permute.xlu0 %345
    %351 = vrot.lane.b32.xlu0 %v155, 32
    %v352 = vpop.permute.xlu0 %351
    %353 = vrot.lane.b32.xlu0 %v158, 32
    %v354 = vpop.permute.xlu0 %353
    %355 = vrot.lane.b32.xlu0 0.0, 32
    %v356 = vpop.permute.xlu0 %355
    %360 = vrot.lane.b32.xlu0 %v343, 64
    %v361 = vpop.permute.xlu0 %360
    %363 = vrot.lane.b32.xlu0 %v155, 64
    %v364 = vpop.permute.xlu0 %363
    %365 = vrot.lane.b32.xlu0 %v158, 64
    %v366 = vpop.permute.xlu0 %365
    %367 = vrot.lane.b32.xlu0 0.0, 64
    %v368 = vpop.permute.xlu0 %367
    %372 = vrot.lane.b32.xlu0 %v343, 96
    %v373 = vpop.permute.xlu0 %372
    %375 = vrot.lane.b32.xlu0 %v155, 96
    %v376 = vpop.permute.xlu0 %375
    %377 = vrot.lane.b32.xlu0 %v158, 96
    %v378 = vpop.permute.xlu0 %377
    %379 = vrot.lane.b32.xlu0 0.0, 96
    %v380 = vpop.permute.xlu0 %379
    %v384 = vsel %vm130, %v155, %v346
    %v385 = vsel %vm130, %v158, %v346
    %v386 = vsel %vm130, 0.0, %v346
    %v387 = vsel %vm92, %v384, %v352
    %v388 = vsel %vm92, %v385, %v354
    %v389 = vsel %vm92, %v386, %v356
    %v390 = vsel %vm260, %v387, %v361
    %v391 = vsel %vm260, %v388, %v361
    %v392 = vsel %vm260, %v389, %v361
    %v393 = vsel %vm130, %v364, %v373
    %v394 = vsel %vm130, %v366, %v373
    %v395 = vsel %vm130, %v368, %v373
    %v396 = vsel %vm92, %v393, %v376
    %v397 = vsel %vm92, %v394, %v378
    %v398 = vsel %vm92, %v395, %v380
    %v399 = vsel %vm260, %v396, %v343
    %v400 = vsel %vm260, %v397, %v343
    %v401 = vsel %vm260, %v398, %v343
    %vm402 = vcmp.ge.s32.totalorder %v69, 64
    %vm403 = vcmp.lt.s32.totalorder %v69, 96
    %vm404 = vmand %vm402, %vm403
    %v405 = vadd.s32 %v69, 128
    %vm406 = vcmp.ge.s32.totalorder %v69, 128
    %vm407 = vcmp.ge.s32.totalorder %v405, 128
    %vm408 = vcmp.lt.s32.totalorder %v69, 192
    %vm409 = vcmp.lt.s32.totalorder %v405, 192
    %vm410 = vmand %vm406, %vm408
    %vm411 = vmand %vm407, %vm409
    %v412 = vtanh.pop %v155
    %v413 = vxor.u32 %v155, 2147483648
    %v414 = vmul.f32 %v413, 1.442695
    %v415 = vpow.pop %v414
    %v416 = vadd.f32 %v415, 1.0
    %v417 = vrcp.pop %v416
    %v418 = vmul.f32 %v416, %v417
    %v419 = vsub.f32 1.0, %v418
    %v420 = vmul.f32 %v417, %v419
    %v421 = vadd.f32 %v417, %v420
    %vm422 = vweird.f32 %v416
    %vm423 = vweird.f32 %v417
    %vm424 = vmor %vm422, %vm423
    %v425 = vsel %vm424, %v417, %v421
    %v426 = vand.u32 2147483647, %v416
    %vm427 = vcmp.eq.f32.partialorder %v426, 8.507059e+37
    %v428 = vand.u32 %v416, 2147483648
    %v429 = vor.u32 1.1754944e-38, %v428
    %v430 = vsel %vm427, %v429, %v425
    %v431 = vmul.f32 1.0, %v430
    %v432 = vsel %vm404, %v412, %v431
    %434 = vrot.lane.b32.xlu0 %v432, 64
    %v435 = vpop.permute.xlu0 %434
    %v437 = vmul.f32 %v432, %v435
    %v438 = vtanh.pop %v437
    %440 = vrot.lane.b32.xlu0 %v438, 96
    %v441 = vpop.permute.xlu0 %440
    %v443 = vmul.f32 %v432, %v441
    %445 = vrot.lane.b32.xlu0 %v443, 32
    %v446 = vpop.permute.xlu0 %445
    %v448 = vsel %vm130, %v446, 0.0
    %v449 = vsel %vm130, %v437, 0.0
    %v451 = vsel %vm92, %v448, 0
    %453 = vmatpush.msra.mxu0 0.0
    %454 = vmatpush.msra.mxu0 0.0
    %455 = vmatpush.msra.mxu0 0.0
    %456 = vmatpush.msra.mxu0 0.0
    %457 = vmatpush.msra.mxu0 0.0
    %458 = vmatpush.msra.mxu0 0.0
    %459 = vmatpush.msra.mxu0 0.0
    %460 = vmatpush.msra.mxu0 0.0
    %461 = vmatpush.msra.mxu0 %v328
    %462 = vmatpush.msra.mxu0 %v327
    %463 = vmatpush.msra.mxu0 %v326
    %464 = vmatpush.msra.mxu0 %v325
    %465 = vmatpush.msra.mxu0 %v264
    %466 = vmatpush.msra.mxu0 %v263
    %467 = vmatpush.msra.mxu0 %v262
    %468 = vmatpush.msra.mxu0 %v261
    %469 = vmatmul.f32.gmra.mxu0 %v451
    %v470 = vpop.f32.mrf.mxu0
    %v471 = vadd.f32 0.0, %v470
    %472 = vdwg.mxu0
    %473 = vmatpush.msra.mxu0 0.0
    %474 = vmatpush.msra.mxu0 0.0
    %475 = vmatpush.msra.mxu0 0.0
    %476 = vmatpush.msra.mxu0 0.0
    %477 = vmatpush.msra.mxu0 0.0
    %478 = vmatpush.msra.mxu0 0.0
    %479 = vmatpush.msra.mxu0 0.0
    %480 = vmatpush.msra.mxu0 0.0
    %481 = vmatpush.msra.mxu0 %v340
    %482 = vmatpush.msra.mxu0 %v339
    %483 = vmatpush.msra.mxu0 %v338
    %484 = vmatpush.msra.mxu0 %v337
    %485 = vmatpush.msra.mxu0 %v276
    %486 = vmatpush.msra.mxu0 %v275
    %487 = vmatpush.msra.mxu0 %v274
    %488 = vmatpush.msra.mxu0 %v273
    %489 = vmatmul.f32.gmra.mxu0 %v451
    %v490 = vpop.f32.mrf.mxu0
    %v491 = vadd.f32 0.0, %v490
    %492 = vdwg.mxu0
    %v495 = vrot.slane %v471, 6
    %v496 = vrot.slane %v491, 6
    %v499 = vadd.f32 %v390, %v495
    %v500 = vadd.f32 %v399, %v496
    %v501 = vtanh.pop %v499
    %v502 = vtanh.pop %v500
    %v503 = vxor.u32 %v499, 2147483648
    %v504 = vxor.u32 %v500, 2147483648
    %v505 = vmul.f32 %v503, 1.442695
    %v506 = vpow.pop %v505
    %v507 = vmul.f32 %v504, 1.442695
    %v508 = vpow.pop %v507
    %v509 = vadd.f32 %v506, 1.0
    %v510 = vadd.f32 %v508, 1.0
    %v511 = vrcp.pop %v509
    %v512 = vmul.f32 %v509, %v511
    %v513 = vsub.f32 1.0, %v512
    %v514 = vmul.f32 %v511, %v513
    %v515 = vadd.f32 %v511, %v514
    %vm516 = vweird.f32 %v509
    %vm517 = vweird.f32 %v511
    %vm518 = vmor %vm516, %vm517
    %v519 = vsel %vm518, %v511, %v515
    %v520 = vand.u32 2147483647, %v509
    %vm521 = vcmp.eq.f32.partialorder %v520, 8.507059e+37
    %v522 = vand.u32 %v509, 2147483648
    %v523 = vor.u32 1.1754944e-38, %v522
    %v524 = vsel %vm521, %v523, %v519
    %v525 = vmul.f32 1.0, %v524
    %v526 = vrcp.pop %v510
    %v527 = vmul.f32 %v510, %v526
    %v528 = vsub.f32 1.0, %v527
    %v529 = vmul.f32 %v526, %v528
    %v530 = vadd.f32 %v526, %v529
    %vm531 = vweird.f32 %v510
    %vm532 = vweird.f32 %v526
    %vm533 = vmor %vm531, %vm532
    %v534 = vsel %vm533, %v526, %v530
    %v535 = vand.u32 2147483647, %v510
    %vm536 = vcmp.eq.f32.partialorder %v535, 8.507059e+37
    %v537 = vand.u32 %v510, 2147483648
    %v538 = vor.u32 1.1754944e-38, %v537
    %v539 = vsel %vm536, %v538, %v534
    %v540 = vmul.f32 1.0, %v539
    %v541 = vsel %vm410, %v501, %v525
    %v542 = vsel %vm411, %v502, %v540
    %v544 = vrot.slane %v449, 6
    %545 = vrot.lane.b32.xlu0 %v544, 64
    %v546 = vpop.permute.xlu0 %545
    %v548 = vmul.f32 %v541, %v546
    %v549 = vmul.f32 %v541, %v542
    %551 = vrot.lane.b32.xlu0 %v549, 64
    %v552 = vpop.permute.xlu0 %551
    %v554 = vadd.f32 %v548, %v552
    %v555 = vtanh.pop %v554
    %v556 = vmul.f32 %v542, %v555
    %v558 = vrot.slane %v556, 2
    %559 = vrot.lane.b32.xlu0 %v558, 64
    %v560 = vpop.permute.xlu0 %559
    %v561 = vsel %vm92, %v560, 0
    %563 = vmatpush.msra.mxu0 0.0
    %564 = vmatpush.msra.mxu0 0.0
    %565 = vmatpush.msra.mxu0 0.0
    %566 = vmatpush.msra.mxu0 0.0
    %567 = vmatpush.msra.mxu0 0.0
    %568 = vmatpush.msra.mxu0 0.0
    %569 = vmatpush.msra.mxu0 0.0
    %570 = vmatpush.msra.mxu0 0.0
    %571 = vmatpush.msra.mxu0 %v328
    %572 = vmatpush.msra.mxu0 %v327
    %573 = vmatpush.msra.mxu0 %v326
    %574 = vmatpush.msra.mxu0 %v325
    %575 = vmatpush.msra.mxu0 %v264
    %576 = vmatpush.msra.mxu0 %v263
    %577 = vmatpush.msra.mxu0 %v262
    %578 = vmatpush.msra.mxu0 %v261
    %579 = vmatmul.f32.gmra.mxu0 %v561
    %v580 = vpop.f32.mrf.mxu0
    %v581 = vadd.f32 0.0, %v580
    %582 = vdwg.mxu0
    %583 = vmatpush.msra.mxu0 0.0
    %584 = vmatpush.msra.mxu0 0.0
    %585 = vmatpush.msra.mxu0 0.0
    %586 = vmatpush.msra.mxu0 0.0
    %587 = vmatpush.msra.mxu0 0.0
    %588 = vmatpush.msra.mxu0 0.0
    %589 = vmatpush.msra.mxu0 0.0
    %590 = vmatpush.msra.mxu0 0.0
    %591 = vmatpush.msra.mxu0 %v340
    %592 = vmatpush.msra.mxu0 %v339
    %593 = vmatpush.msra.mxu0 %v338
    %594 = vmatpush.msra.mxu0 %v337
    %595 = vmatpush.msra.mxu0 %v276
    %596 = vmatpush.msra.mxu0 %v275
    %597 = vmatpush.msra.mxu0 %v274
    %598 = vmatpush.msra.mxu0 %v273
    %599 = vmatmul.f32.gmra.mxu0 %v561
    %v600 = vpop.f32.mrf.mxu0
    %v601 = vadd.f32 0.0, %v600
    %602 = vdwg.mxu0
    %v605 = vrot.slane %v581, 4
    %v606 = vrot.slane %v601, 4
    %v609 = vadd.f32 %v390, %v605
    %v610 = vadd.f32 %v399, %v606
    %v611 = vtanh.pop %v609
    %v612 = vtanh.pop %v610
    %v613 = vxor.u32 %v609, 2147483648
    %v614 = vxor.u32 %v610, 2147483648
    %v615 = vmul.f32 %v613, 1.442695
    %v616 = vpow.pop %v615
    %v617 = vmul.f32 %v614, 1.442695
    %v618 = vpow.pop %v617
    %v619 = vadd.f32 %v616, 1.0
    %v620 = vadd.f32 %v618, 1.0
    %v621 = vrcp.pop %v619
    %v622 = vmul.f32 %v619, %v621
    %v623 = vsub.f32 1.0, %v622
    %v624 = vmul.f32 %v621, %v623
    %v625 = vadd.f32 %v621, %v624
    %vm626 = vweird.f32 %v619
    %vm627 = vweird.f32 %v621
    %vm628 = vmor %vm626, %vm627
    %v629 = vsel %vm628, %v621, %v625
    %v630 = vand.u32 2147483647, %v619
    %vm631 = vcmp.eq.f32.partialorder %v630, 8.507059e+37
    %v632 = vand.u32 %v619, 2147483648
    %v633 = vor.u32 1.1754944e-38, %v632
    %v634 = vsel %vm631, %v633, %v629
    %v635 = vmul.f32 1.0, %v634
    %v636 = vrcp.pop %v620
    %v637 = vmul.f32 %v620, %v636
    %v638 = vsub.f32 1.0, %v637
    %v639 = vmul.f32 %v636, %v638
    %v640 = vadd.f32 %v636, %v639
    %vm641 = vweird.f32 %v620
    %vm642 = vweird.f32 %v636
    %vm643 = vmor %vm641, %vm642
    %v644 = vsel %vm643, %v636, %v640
    %v645 = vand.u32 2147483647, %v620
    %vm646 = vcmp.eq.f32.partialorder %v645, 8.507059e+37
    %v647 = vand.u32 %v620, 2147483648
    %v648 = vor.u32 1.1754944e-38, %v647
    %v649 = vsel %vm646, %v648, %v644
    %v650 = vmul.f32 1.0, %v649
    %v651 = vsel %vm410, %v611, %v635
    %v652 = vsel %vm411, %v612, %v650
    %v654 = vrot.slane %v554, 6
    %v656 = vmul.f32 %v651, %v654
    %v657 = vmul.f32 %v651, %v652
    %659 = vrot.lane.b32.xlu0 %v657, 64
    %v660 = vpop.permute.xlu0 %659
    %v662 = vadd.f32 %v656, %v660
    %v663 = vtanh.pop %v662
    %v664 = vmul.f32 %v652, %v663
    %v666 = vrot.slane %v664, 4
    %667 = vrot.lane.b32.xlu0 %v666, 64
    %v668 = vpop.permute.xlu0 %667
    %v669 = vsel %vm92, %v668, 0
    %671 = vmatpush.msra.mxu0 0.0
    %672 = vmatpush.msra.mxu0 0.0
    %673 = vmatpush.msra.mxu0 0.0
    %674 = vmatpush.msra.mxu0 0.0
    %675 = vmatpush.msra.mxu0 0.0
    %676 = vmatpush.msra.mxu0 0.0
    %677 = vmatpush.msra.mxu0 0.0
    %678 = vmatpush.msra.mxu0 0.0
    %679 = vmatpush.msra.mxu0 %v328
    %680 = vmatpush.msra.mxu0 %v327
    %681 = vmatpush.msra.mxu0 %v326
    %682 = vmatpush.msra.mxu0 %v325
    %683 = vmatpush.msra.mxu0 %v264
    %684 = vmatpush.msra.mxu0 %v263
    %685 = vmatpush.msra.mxu0 %v262
    %686 = vmatpush.msra.mxu0 %v261
    %687 = vmatmul.f32.gmra.mxu0 %v669
    %v688 = vpop.f32.mrf.mxu0
    %v689 = vadd.f32 0.0, %v688
    %690 = vdwg.mxu0
    %691 = vmatpush.msra.mxu0 0.0
    %692 = vmatpush.msra.mxu0 0.0
    %693 = vmatpush.msra.mxu0 0.0
    %694 = vmatpush.msra.mxu0 0.0
    %695 = vmatpush.msra.mxu0 0.0
    %696 = vmatpush.msra.mxu0 0.0
    %697 = vmatpush.msra.mxu0 0.0
    %698 = vmatpush.msra.mxu0 0.0
    %699 = vmatpush.msra.mxu0 %v340
    %700 = vmatpush.msra.mxu0 %v339
    %701 = vmatpush.msra.mxu0 %v338
    %702 = vmatpush.msra.mxu0 %v337
    %703 = vmatpush.msra.mxu0 %v276
    %704 = vmatpush.msra.mxu0 %v275
    %705 = vmatpush.msra.mxu0 %v274
    %706 = vmatpush.msra.mxu0 %v273
    %707 = vmatmul.f32.gmra.mxu0 %v669
    %v708 = vpop.f32.mrf.mxu0
    %v709 = vadd.f32 0.0, %v708
    %710 = vdwg.mxu0
    %v713 = vrot.slane %v689, 2
    %v714 = vrot.slane %v709, 2
    %v717 = vadd.f32 %v390, %v713
    %v718 = vadd.f32 %v399, %v714
    %v719 = vtanh.pop %v717
    %v720 = vtanh.pop %v718
    %v721 = vxor.u32 %v717, 2147483648
    %v722 = vxor.u32 %v718, 2147483648
    %v723 = vmul.f32 %v721, 1.442695
    %v724 = vpow.pop %v723
    %v725 = vmul.f32 %v722, 1.442695
    %v726 = vpow.pop %v725
    %v727 = vadd.f32 %v724, 1.0
    %v728 = vadd.f32 %v726, 1.0
    %v729 = vrcp.pop %v727
    %v730 = vmul.f32 %v727, %v729
    %v731 = vsub.f32 1.0, %v730
    %v732 = vmul.f32 %v729, %v731
    %v733 = vadd.f32 %v729, %v732
    %vm734 = vweird.f32 %v727
    %vm735 = vweird.f32 %v729
    %vm736 = vmor %vm734, %vm735
    %v737 = vsel %vm736, %v729, %v733
    %v738 = vand.u32 2147483647, %v727
    %vm739 = vcmp.eq.f32.partialorder %v738, 8.507059e+37
    %v740 = vand.u32 %v727, 2147483648
    %v741 = vor.u32 1.1754944e-38, %v740
    %v742 = vsel %vm739, %v741, %v737
    %v743 = vmul.f32 1.0, %v742
    %v744 = vrcp.pop %v728
    %v745 = vmul.f32 %v728, %v744
    %v746 = vsub.f32 1.0, %v745
    %v747 = vmul.f32 %v744, %v746
    %v748 = vadd.f32 %v744, %v747
    %vm749 = vweird.f32 %v728
    %vm750 = vweird.f32 %v744
    %vm751 = vmor %vm749, %vm750
    %v752 = vsel %vm751, %v744, %v748
    %v753 = vand.u32 2147483647, %v728
    %vm754 = vcmp.eq.f32.partialorder %v753, 8.507059e+37
    %v755 = vand.u32 %v728, 2147483648
    %v756 = vor.u32 1.1754944e-38, %v755
    %v757 = vsel %vm754, %v756, %v752
    %v758 = vmul.f32 1.0, %v757
    %v759 = vsel %vm410, %v719, %v743
    %v760 = vsel %vm411, %v720, %v758
    %v762 = vrot.slane %v662, 6
    %v764 = vmul.f32 %v759, %v762
    %v765 = vmul.f32 %v759, %v760
    %767 = vrot.lane.b32.xlu0 %v765, 64
    %v768 = vpop.permute.xlu0 %767
    %v770 = vadd.f32 %v764, %v768
    %v771 = vtanh.pop %v770
    %v772 = vmul.f32 %v760, %v771
    %v774 = vrot.slane %v772, 6
    %775 = vrot.lane.b32.xlu0 %v774, 64
    %v776 = vpop.permute.xlu0 %775
    %v777 = vsel %vm92, %v776, 0
    %779 = vmatpush.msra.mxu0 0.0
    %780 = vmatpush.msra.mxu0 0.0
    %781 = vmatpush.msra.mxu0 0.0
    %782 = vmatpush.msra.mxu0 0.0
    %783 = vmatpush.msra.mxu0 0.0
    %784 = vmatpush.msra.mxu0 0.0
    %785 = vmatpush.msra.mxu0 0.0
    %786 = vmatpush.msra.mxu0 0.0
    %787 = vmatpush.msra.mxu0 %v328
    %788 = vmatpush.msra.mxu0 %v327
    %789 = vmatpush.msra.mxu0 %v326
    %790 = vmatpush.msra.mxu0 %v325
    %791 = vmatpush.msra.mxu0 %v264
    %792 = vmatpush.msra.mxu0 %v263
    %793 = vmatpush.msra.mxu0 %v262
    %794 = vmatpush.msra.mxu0 %v261
    %795 = vmatmul.f32.gmra.mxu0 %v777
    %v796 = vpop.f32.mrf.mxu0
    %v797 = vadd.f32 0.0, %v796
    %798 = vdwg.mxu0
    %799 = vmatpush.msra.mxu0 0.0
    %800 = vmatpush.msra.mxu0 0.0
    %801 = vmatpush.msra.mxu0 0.0
    %802 = vmatpush.msra.mxu0 0.0
    %803 = vmatpush.msra.mxu0 0.0
    %804 = vmatpush.msra.mxu0 0.0
    %805 = vmatpush.msra.mxu0 0.0
    %806 = vmatpush.msra.mxu0 0.0
    %807 = vmatpush.msra.mxu0 %v340
    %808 = vmatpush.msra.mxu0 %v339
    %809 = vmatpush.msra.mxu0 %v338
    %810 = vmatpush.msra.mxu0 %v337
    %811 = vmatpush.msra.mxu0 %v276
    %812 = vmatpush.msra.mxu0 %v275
    %813 = vmatpush.msra.mxu0 %v274
    %814 = vmatpush.msra.mxu0 %v273
    %815 = vmatmul.f32.gmra.mxu0 %v777
    %v816 = vpop.f32.mrf.mxu0
    %v817 = vadd.f32 0.0, %v816
    %818 = vdwg.mxu0
    %v819 = vadd.f32 %v391, %v797
    %v820 = vadd.f32 %v400, %v817
    %v821 = vtanh.pop %v819
    %v822 = vtanh.pop %v820
    %v823 = vxor.u32 %v819, 2147483648
    %v824 = vxor.u32 %v820, 2147483648
    %v825 = vmul.f32 %v823, 1.442695
    %v826 = vpow.pop %v825
    %v827 = vmul.f32 %v824, 1.442695
    %v828 = vpow.pop %v827
    %v829 = vadd.f32 %v826, 1.0
    %v830 = vadd.f32 %v828, 1.0
    %v831 = vrcp.pop %v829
    %v832 = vmul.f32 %v829, %v831
    %v833 = vsub.f32 1.0, %v832
    %v834 = vmul.f32 %v831, %v833
    %v835 = vadd.f32 %v831, %v834
    %vm836 = vweird.f32 %v829
    %vm837 = vweird.f32 %v831
    %vm838 = vmor %vm836, %vm837
    %v839 = vsel %vm838, %v831, %v835
    %v840 = vand.u32 2147483647, %v829
    %vm841 = vcmp.eq.f32.partialorder %v840, 8.507059e+37
    %v842 = vand.u32 %v829, 2147483648
    %v843 = vor.u32 1.1754944e-38, %v842
    %v844 = vsel %vm841, %v843, %v839
    %v845 = vmul.f32 1.0, %v844
    %v846 = vrcp.pop %v830
    %v847 = vmul.f32 %v830, %v846
    %v848 = vsub.f32 1.0, %v847
    %v849 = vmul.f32 %v846, %v848
    %v850 = vadd.f32 %v846, %v849
    %vm851 = vweird.f32 %v830
    %vm852 = vweird.f32 %v846
    %vm853 = vmor %vm851, %vm852
    %v854 = vsel %vm853, %v846, %v850
    %v855 = vand.u32 2147483647, %v830
    %vm856 = vcmp.eq.f32.partialorder %v855, 8.507059e+37
    %v857 = vand.u32 %v830, 2147483648
    %v858 = vor.u32 1.1754944e-38, %v857
    %v859 = vsel %vm856, %v858, %v854
    %v860 = vmul.f32 1.0, %v859
    %v861 = vsel %vm410, %v821, %v845
    %v862 = vsel %vm411, %v822, %v860
    %v864 = vrot.slane %v770, 6
    %v866 = vmul.f32 %v861, %v864
    %v867 = vmul.f32 %v861, %v862
    %869 = vrot.lane.b32.xlu0 %v867, 64
    %v870 = vpop.permute.xlu0 %869
    %v872 = vadd.f32 %v866, %v870
    %v873 = vtanh.pop %v872
    %v874 = vmul.f32 %v862, %v873
    %876 = vrot.lane.b32.xlu0 %v874, 64
    %v877 = vpop.permute.xlu0 %876
    %v878 = vsel %vm92, %v877, 0
    %880 = vmatpush.msra.mxu0 0.0
    %881 = vmatpush.msra.mxu0 0.0
    %882 = vmatpush.msra.mxu0 0.0
    %883 = vmatpush.msra.mxu0 0.0
    %884 = vmatpush.msra.mxu0 0.0
    %885 = vmatpush.msra.mxu0 0.0
    %886 = vmatpush.msra.mxu0 0.0
    %887 = vmatpush.msra.mxu0 0.0
    %888 = vmatpush.msra.mxu0 %v328
    %889 = vmatpush.msra.mxu0 %v327
    %890 = vmatpush.msra.mxu0 %v326
    %891 = vmatpush.msra.mxu0 %v325
    %892 = vmatpush.msra.mxu0 %v264
    %893 = vmatpush.msra.mxu0 %v263
    %894 = vmatpush.msra.mxu0 %v262
    %895 = vmatpush.msra.mxu0 %v261
    %896 = vmatmul.f32.gmra.mxu0 %v878
    %v897 = vpop.f32.mrf.mxu0
    %v898 = vadd.f32 0.0, %v897
    %899 = vdwg.mxu0
    %900 = vmatpush.msra.mxu0 0.0
    %901 = vmatpush.msra.mxu0 0.0
    %902 = vmatpush.msra.mxu0 0.0
    %903 = vmatpush.msra.mxu0 0.0
    %904 = vmatpush.msra.mxu0 0.0
    %905 = vmatpush.msra.mxu0 0.0
    %906 = vmatpush.msra.mxu0 0.0
    %907 = vmatpush.msra.mxu0 0.0
    %908 = vmatpush.msra.mxu0 %v340
    %909 = vmatpush.msra.mxu0 %v339
    %910 = vmatpush.msra.mxu0 %v338
    %911 = vmatpush.msra.mxu0 %v337
    %912 = vmatpush.msra.mxu0 %v276
    %913 = vmatpush.msra.mxu0 %v275
    %914 = vmatpush.msra.mxu0 %v274
    %915 = vmatpush.msra.mxu0 %v273
    %916 = vmatmul.f32.gmra.mxu0 %v878
    %v917 = vpop.f32.mrf.mxu0
    %v918 = vadd.f32 0.0, %v917
    %919 = vdwg.mxu0
    %v922 = vrot.slane %v898, 6
    %v923 = vrot.slane %v918, 6
    %v926 = vadd.f32 %v391, %v922
    %v927 = vadd.f32 %v400, %v923
    %v928 = vtanh.pop %v926
    %v929 = vtanh.pop %v927
    %v930 = vxor.u32 %v926, 2147483648
    %v931 = vxor.u32 %v927, 2147483648
    %v932 = vmul.f32 %v930, 1.442695
    %v933 = vpow.pop %v932
    %v934 = vmul.f32 %v931, 1.442695
    %v935 = vpow.pop %v934
    %v936 = vadd.f32 %v933, 1.0
    %v937 = vadd.f32 %v935, 1.0
    %v938 = vrcp.pop %v936
    %v939 = vmul.f32 %v936, %v938
    %v940 = vsub.f32 1.0, %v939
    %v941 = vmul.f32 %v938, %v940
    %v942 = vadd.f32 %v938, %v941
    %vm943 = vweird.f32 %v936
    %vm944 = vweird.f32 %v938
    %vm945 = vmor %vm943, %vm944
    %v946 = vsel %vm945, %v938, %v942
    %v947 = vand.u32 2147483647, %v936
    %vm948 = vcmp.eq.f32.partialorder %v947, 8.507059e+37
    %v949 = vand.u32 %v936, 2147483648
    %v950 = vor.u32 1.1754944e-38, %v949
    %v951 = vsel %vm948, %v950, %v946
    %v952 = vmul.f32 1.0, %v951
    %v953 = vrcp.pop %v937
    %v954 = vmul.f32 %v937, %v953
    %v955 = vsub.f32 1.0, %v954
    %v956 = vmul.f32 %v953, %v955
    %v957 = vadd.f32 %v953, %v956
    %vm958 = vweird.f32 %v937
    %vm959 = vweird.f32 %v953
    %vm960 = vmor %vm958, %vm959
    %v961 = vsel %vm960, %v953, %v957
    %v962 = vand.u32 2147483647, %v937
    %vm963 = vcmp.eq.f32.partialorder %v962, 8.507059e+37
    %v964 = vand.u32 %v937, 2147483648
    %v965 = vor.u32 1.1754944e-38, %v964
    %v966 = vsel %vm963, %v965, %v961
    %v967 = vmul.f32 1.0, %v966
    %v968 = vsel %vm410, %v928, %v952
    %v969 = vsel %vm411, %v929, %v967
    %v971 = vrot.slane %v872, 6
    %v973 = vmul.f32 %v968, %v971
    %v974 = vmul.f32 %v968, %v969
    %976 = vrot.lane.b32.xlu0 %v974, 64
    %v977 = vpop.permute.xlu0 %976
    %v979 = vadd.f32 %v973, %v977
    %v980 = vtanh.pop %v979
    %v981 = vmul.f32 %v969, %v980
    %v983 = vrot.slane %v981, 2
    %984 = vrot.lane.b32.xlu0 %v983, 64
    %v985 = vpop.permute.xlu0 %984
    %v986 = vsel %vm92, %v985, 0
    %988 = vmatpush.msra.mxu0 0.0
    %989 = vmatpush.msra.mxu0 0.0
    %990 = vmatpush.msra.mxu0 0.0
    %991 = vmatpush.msra.mxu0 0.0
    %992 = vmatpush.msra.mxu0 0.0
    %993 = vmatpush.msra.mxu0 0.0
    %994 = vmatpush.msra.mxu0 0.0
    %995 = vmatpush.msra.mxu0 0.0
    %996 = vmatpush.msra.mxu0 %v328
    %997 = vmatpush.msra.mxu0 %v327
    %998 = vmatpush.msra.mxu0 %v326
    %999 = vmatpush.msra.mxu0 %v325
    %1000 = vmatpush.msra.mxu0 %v264
    %1001 = vmatpush.msra.mxu0 %v263
    %1002 = vmatpush.msra.mxu0 %v262
    %1003 = vmatpush.msra.mxu0 %v261
    %1004 = vmatmul.f32.gmra.mxu0 %v986
    %v1005 = vpop.f32.mrf.mxu0
    %v1006 = vadd.f32 0.0, %v1005
    %1007 = vdwg.mxu0
    %1008 = vmatpush.msra.mxu0 0.0
    %1009 = vmatpush.msra.mxu0 0.0
    %1010 = vmatpush.msra.mxu0 0.0
    %1011 = vmatpush.msra.mxu0 0.0
    %1012 = vmatpush.msra.mxu0 0.0
    %1013 = vmatpush.msra.mxu0 0.0
    %1014 = vmatpush.msra.mxu0 0.0
    %1015 = vmatpush.msra.mxu0 0.0
    %1016 = vmatpush.msra.mxu0 %v340
    %1017 = vmatpush.msra.mxu0 %v339
    %1018 = vmatpush.msra.mxu0 %v338
    %1019 = vmatpush.msra.mxu0 %v337
    %1020 = vmatpush.msra.mxu0 %v276
    %1021 = vmatpush.msra.mxu0 %v275
    %1022 = vmatpush.msra.mxu0 %v274
    %1023 = vmatpush.msra.mxu0 %v273
    %1024 = vmatmul.f32.gmra.mxu0 %v986
    %v1025 = vpop.f32.mrf.mxu0
    %v1026 = vadd.f32 0.0, %v1025
    %1027 = vdwg.mxu0
    %v1030 = vrot.slane %v1006, 4
    %v1031 = vrot.slane %v1026, 4
    %v1034 = vadd.f32 %v391, %v1030
    %v1035 = vadd.f32 %v400, %v1031
    %v1036 = vtanh.pop %v1034
    %v1037 = vtanh.pop %v1035
    %v1038 = vxor.u32 %v1034, 2147483648
    %v1039 = vxor.u32 %v1035, 2147483648
    %v1040 = vmul.f32 %v1038, 1.442695
    %v1041 = vpow.pop %v1040
    %v1042 = vmul.f32 %v1039, 1.442695
    %v1043 = vpow.pop %v1042
    %v1044 = vadd.f32 %v1041, 1.0
    %v1045 = vadd.f32 %v1043, 1.0
    %v1046 = vrcp.pop %v1044
    %v1047 = vmul.f32 %v1044, %v1046
    %v1048 = vsub.f32 1.0, %v1047
    %v1049 = vmul.f32 %v1046, %v1048
    %v1050 = vadd.f32 %v1046, %v1049
    %vm1051 = vweird.f32 %v1044
    %vm1052 = vweird.f32 %v1046
    %vm1053 = vmor %vm1051, %vm1052
    %v1054 = vsel %vm1053, %v1046, %v1050
    %v1055 = vand.u32 2147483647, %v1044
    %vm1056 = vcmp.eq.f32.partialorder %v1055, 8.507059e+37
    %v1057 = vand.u32 %v1044, 2147483648
    %v1058 = vor.u32 1.1754944e-38, %v1057
    %v1059 = vsel %vm1056, %v1058, %v1054
    %v1060 = vmul.f32 1.0, %v1059
    %v1061 = vrcp.pop %v1045
    %v1062 = vmul.f32 %v1045, %v1061
    %v1063 = vsub.f32 1.0, %v1062
    %v1064 = vmul.f32 %v1061, %v1063
    %v1065 = vadd.f32 %v1061, %v1064
    %vm1066 = vweird.f32 %v1045
    %vm1067 = vweird.f32 %v1061
    %vm1068 = vmor %vm1066, %vm1067
    %v1069 = vsel %vm1068, %v1061, %v1065
    %v1070 = vand.u32 2147483647, %v1045
    %vm1071 = vcmp.eq.f32.partialorder %v1070, 8.507059e+37
    %v1072 = vand.u32 %v1045, 2147483648
    %v1073 = vor.u32 1.1754944e-38, %v1072
    %v1074 = vsel %vm1071, %v1073, %v1069
    %v1075 = vmul.f32 1.0, %v1074
    %v1076 = vsel %vm410, %v1036, %v1060
    %v1077 = vsel %vm411, %v1037, %v1075
    %v1079 = vrot.slane %v979, 6
    %v1081 = vmul.f32 %v1076, %v1079
    %v1082 = vmul.f32 %v1076, %v1077
    %1084 = vrot.lane.b32.xlu0 %v1082, 64
    %v1085 = vpop.permute.xlu0 %1084
    %v1087 = vadd.f32 %v1081, %v1085
    %v1088 = vtanh.pop %v1087
    %v1089 = vmul.f32 %v1077, %v1088
    %v1091 = vrot.slane %v1089, 4
    %1092 = vrot.lane.b32.xlu0 %v1091, 64
    %v1093 = vpop.permute.xlu0 %1092
    %v1094 = vsel %vm92, %v1093, 0
    %1096 = vmatpush.msra.mxu0 0.0
    %1097 = vmatpush.msra.mxu0 0.0
    %1098 = vmatpush.msra.mxu0 0.0
    %1099 = vmatpush.msra.mxu0 0.0
    %1100 = vmatpush.msra.mxu0 0.0
    %1101 = vmatpush.msra.mxu0 0.0
    %1102 = vmatpush.msra.mxu0 0.0
    %1103 = vmatpush.msra.mxu0 0.0
    %1104 = vmatpush.msra.mxu0 %v328
    %1105 = vmatpush.msra.mxu0 %v327
    %1106 = vmatpush.msra.mxu0 %v326
    %1107 = vmatpush.msra.mxu0 %v325
    %1108 = vmatpush.msra.mxu0 %v264
    %1109 = vmatpush.msra.mxu0 %v263
    %1110 = vmatpush.msra.mxu0 %v262
    %1111 = vmatpush.msra.mxu0 %v261
    %1112 = vmatmul.f32.gmra.mxu0 %v1094
    %v1113 = vpop.f32.mrf.mxu0
    %v1114 = vadd.f32 0.0, %v1113
    %1115 = vdwg.mxu0
    %1116 = vmatpush.msra.mxu0 0.0
    %1117 = vmatpush.msra.mxu0 0.0
    %1118 = vmatpush.msra.mxu0 0.0
    %1119 = vmatpush.msra.mxu0 0.0
    %1120 = vmatpush.msra.mxu0 0.0
    %1121 = vmatpush.msra.mxu0 0.0
    %1122 = vmatpush.msra.mxu0 0.0
    %1123 = vmatpush.msra.mxu0 0.0
    %1124 = vmatpush.msra.mxu0 %v340
    %1125 = vmatpush.msra.mxu0 %v339
    %1126 = vmatpush.msra.mxu0 %v338
    %1127 = vmatpush.msra.mxu0 %v337
    %1128 = vmatpush.msra.mxu0 %v276
    %1129 = vmatpush.msra.mxu0 %v275
    %1130 = vmatpush.msra.mxu0 %v274
    %1131 = vmatpush.msra.mxu0 %v273
    %1132 = vmatmul.f32.gmra.mxu0 %v1094
    %v1133 = vpop.f32.mrf.mxu0
    %v1134 = vadd.f32 0.0, %v1133
    %1135 = vdwg.mxu0
    %v1138 = vrot.slane %v1114, 2
    %v1139 = vrot.slane %v1134, 2
    %v1142 = vadd.f32 %v391, %v1138
    %v1143 = vadd.f32 %v400, %v1139
    %v1144 = vtanh.pop %v1142
    %v1145 = vtanh.pop %v1143
    %v1146 = vxor.u32 %v1142, 2147483648
    %v1147 = vxor.u32 %v1143, 2147483648
    %v1148 = vmul.f32 %v1146, 1.442695
    %v1149 = vpow.pop %v1148
    %v1150 = vmul.f32 %v1147, 1.442695
    %v1151 = vpow.pop %v1150
    %v1152 = vadd.f32 %v1149, 1.0
    %v1153 = vadd.f32 %v1151, 1.0
    %v1154 = vrcp.pop %v1152
    %v1155 = vmul.f32 %v1152, %v1154
    %v1156 = vsub.f32 1.0, %v1155
    %v1157 = vmul.f32 %v1154, %v1156
    %v1158 = vadd.f32 %v1154, %v1157
    %vm1159 = vweird.f32 %v1152
    %vm1160 = vweird.f32 %v1154
    %vm1161 = vmor %vm1159, %vm1160
    %v1162 = vsel %vm1161, %v1154, %v1158
    %v1163 = vand.u32 2147483647, %v1152
    %vm1164 = vcmp.eq.f32.partialorder %v1163, 8.507059e+37
    %v1165 = vand.u32 %v1152, 2147483648
    %v1166 = vor.u32 1.1754944e-38, %v1165
    %v1167 = vsel %vm1164, %v1166, %v1162
    %v1168 = vmul.f32 1.0, %v1167
    %v1169 = vrcp.pop %v1153
    %v1170 = vmul.f32 %v1153, %v1169
    %v1171 = vsub.f32 1.0, %v1170
    %v1172 = vmul.f32 %v1169, %v1171
    %v1173 = vadd.f32 %v1169, %v1172
    %vm1174 = vweird.f32 %v1153
    %vm1175 = vweird.f32 %v1169
    %vm1176 = vmor %vm1174, %vm1175
    %v1177 = vsel %vm1176, %v1169, %v1173
    %v1178 = vand.u32 2147483647, %v1153
    %vm1179 = vcmp.eq.f32.partialorder %v1178, 8.507059e+37
    %v1180 = vand.u32 %v1153, 2147483648
    %v1181 = vor.u32 1.1754944e-38, %v1180
    %v1182 = vsel %vm1179, %v1181, %v1177
    %v1183 = vmul.f32 1.0, %v1182
    %v1184 = vsel %vm410, %v1144, %v1168
    %v1185 = vsel %vm411, %v1145, %v1183
    %v1187 = vrot.slane %v1087, 6
    %v1189 = vmul.f32 %v1184, %v1187
    %v1190 = vmul.f32 %v1184, %v1185
    %1192 = vrot.lane.b32.xlu0 %v1190, 64
    %v1193 = vpop.permute.xlu0 %1192
    %v1195 = vadd.f32 %v1189, %v1193
    %v1196 = vtanh.pop %v1195
    %v1197 = vmul.f32 %v1185, %v1196
    %v1199 = vrot.slane %v1197, 6
    %1200 = vrot.lane.b32.xlu0 %v1199, 64
    %v1201 = vpop.permute.xlu0 %1200
    %v1202 = vsel %vm92, %v1201, 0
    %1204 = vmatpush.msra.mxu0 0.0
    %1205 = vmatpush.msra.mxu0 0.0
    %1206 = vmatpush.msra.mxu0 0.0
    %1207 = vmatpush.msra.mxu0 0.0
    %1208 = vmatpush.msra.mxu0 0.0
    %1209 = vmatpush.msra.mxu0 0.0
    %1210 = vmatpush.msra.mxu0 0.0
    %1211 = vmatpush.msra.mxu0 0.0
    %1212 = vmatpush.msra.mxu0 %v328
    %1213 = vmatpush.msra.mxu0 %v327
    %1214 = vmatpush.msra.mxu0 %v326
    %1215 = vmatpush.msra.mxu0 %v325
    %1216 = vmatpush.msra.mxu0 %v264
    %1217 = vmatpush.msra.mxu0 %v263
    %1218 = vmatpush.msra.mxu0 %v262
    %1219 = vmatpush.msra.mxu0 %v261
    %1220 = vmatmul.f32.gmra.mxu0 %v1202
    %v1221 = vpop.f32.mrf.mxu0
    %v1222 = vadd.f32 0.0, %v1221
    %1223 = vdwg.mxu0
    %1224 = vmatpush.msra.mxu0 0.0
    %1225 = vmatpush.msra.mxu0 0.0
    %1226 = vmatpush.msra.mxu0 0.0
    %1227 = vmatpush.msra.mxu0 0.0
    %1228 = vmatpush.msra.mxu0 0.0
    %1229 = vmatpush.msra.mxu0 0.0
    %1230 = vmatpush.msra.mxu0 0.0
    %1231 = vmatpush.msra.mxu0 0.0
    %1232 = vmatpush.msra.mxu0 %v340
    %1233 = vmatpush.msra.mxu0 %v339
    %1234 = vmatpush.msra.mxu0 %v338
    %1235 = vmatpush.msra.mxu0 %v337
    %1236 = vmatpush.msra.mxu0 %v276
    %1237 = vmatpush.msra.mxu0 %v275
    %1238 = vmatpush.msra.mxu0 %v274
    %1239 = vmatpush.msra.mxu0 %v273
    %1240 = vmatmul.f32.gmra.mxu0 %v1202
    %v1241 = vpop.f32.mrf.mxu0
    %v1242 = vadd.f32 0.0, %v1241
    %1243 = vdwg.mxu0
    %v1244 = vadd.f32 %v392, %v1222
    %v1245 = vadd.f32 %v401, %v1242
    %v1246 = vtanh.pop %v1244
    %v1247 = vtanh.pop %v1245
    %v1248 = vxor.u32 %v1244, 2147483648
    %v1249 = vxor.u32 %v1245, 2147483648
    %v1250 = vmul.f32 %v1248, 1.442695
    %v1251 = vpow.pop %v1250
    %v1252 = vmul.f32 %v1249, 1.442695
    %v1253 = vpow.pop %v1252
    %v1254 = vadd.f32 %v1251, 1.0
    %v1255 = vadd.f32 %v1253, 1.0
    %v1256 = vrcp.pop %v1254
    %v1257 = vmul.f32 %v1254, %v1256
    %v1258 = vsub.f32 1.0, %v1257
    %v1259 = vmul.f32 %v1256, %v1258
    %v1260 = vadd.f32 %v1256, %v1259
    %vm1261 = vweird.f32 %v1254
    %vm1262 = vweird.f32 %v1256
    %vm1263 = vmor %vm1261, %vm1262
    %v1264 = vsel %vm1263, %v1256, %v1260
    %v1265 = vand.u32 2147483647, %v1254
    %vm1266 = vcmp.eq.f32.partialorder %v1265, 8.507059e+37
    %v1267 = vand.u32 %v1254, 2147483648
    %v1268 = vor.u32 1.1754944e-38, %v1267
    %v1269 = vsel %vm1266, %v1268, %v1264
    %v1270 = vmul.f32 1.0, %v1269
    %v1271 = vrcp.pop %v1255
    %v1272 = vmul.f32 %v1255, %v1271
    %v1273 = vsub.f32 1.0, %v1272
    %v1274 = vmul.f32 %v1271, %v1273
    %v1275 = vadd.f32 %v1271, %v1274
    %vm1276 = vweird.f32 %v1255
    %vm1277 = vweird.f32 %v1271
    %vm1278 = vmor %vm1276, %vm1277
    %v1279 = vsel %vm1278, %v1271, %v1275
    %v1280 = vand.u32 2147483647, %v1255
    %vm1281 = vcmp.eq.f32.partialorder %v1280, 8.507059e+37
    %v1282 = vand.u32 %v1255, 2147483648
    %v1283 = vor.u32 1.1754944e-38, %v1282
    %v1284 = vsel %vm1281, %v1283, %v1279
    %v1285 = vmul.f32 1.0, %v1284
    %v1286 = vsel %vm410, %v1246, %v1270
    %v1287 = vsel %vm411, %v1247, %v1285
    %v1289 = vrot.slane %v1195, 6
    %v1291 = vmul.f32 %v1286, %v1289
    %v1292 = vmul.f32 %v1286, %v1287
    %1294 = vrot.lane.b32.xlu0 %v1292, 64
    %v1295 = vpop.permute.xlu0 %1294
    %v1297 = vadd.f32 %v1291, %v1295
    %v1298 = vtanh.pop %v1297
    %v1299 = vmul.f32 %v1287, %v1298
    %v1300 = vld [vmem:[#allocation5] sm:$0xff]
    %v1301 = vld [vmem:[#allocation5 + $0x8] sm:$0xff]
    %v1302 = vld [vmem:[#allocation5 + $0x10] sm:$0xff]
    %v1303 = vld [vmem:[#allocation5 + $0x18] sm:$0xff]
    %v1304 = vld [vmem:[%s9] sm:$0x1]
    %v1306 = vperm.slane %v1304, 0
    %1309 = vrot.lane.b32.xlu0 %v1299, 32
    %v1310 = vpop.permute.xlu0 %1309
    %v1311 = vsel %vm130, %v1310, 0
    %1313 = vmatpush.msra.mxu0 0.0
    %1314 = vmatpush.msra.mxu0 0.0
    %1315 = vmatpush.msra.mxu0 0.0
    %1316 = vmatpush.msra.mxu0 0.0
    %1317 = vmatpush.msra.mxu0 0.0
    %1318 = vmatpush.msra.mxu0 0.0
    %1319 = vmatpush.msra.mxu0 0.0
    %1320 = vmatpush.msra.mxu0 0.0
    %1321 = vmatpush.msra.mxu0 0.0
    %1322 = vmatpush.msra.mxu0 0.0
    %1323 = vmatpush.msra.mxu0 0.0
    %1324 = vmatpush.msra.mxu0 0.0
    %1325 = vmatpush.msra.mxu0 %v1303
    %1326 = vmatpush.msra.mxu0 %v1302
    %1327 = vmatpush.msra.mxu0 %v1301
    %1328 = vmatpush.msra.mxu0 %v1300
    %1329 = vmatmul.f32.gmra.mxu0 %v1311
    %v1330 = vpop.f32.mrf.mxu0
    %v1331 = vadd.f32 %v1306, %v1330
    %1332 = vdwg.mxu0
    %vm1333 = vcmask 517120
    %1334 = vst.msk [vmem:[#allocation7] sm:$0x3] %vm1333, %v1331
    // Predicated region
    $region50: #{lstm_model_forward.1} parent=1 // pred_check
      _
    $region51: #{lstm_model_forward.1} parent=1 // pred_check_branch
      %1336 = sbr.rel (0) target = $region53
    $region52: #{lstm_model_forward.1} parent=1 // pred_region
      %1338 = vsyncadd [#allocation4], 0
      %s1340 = sshll.u32 [#allocation7], 4
      %s1341 = int_to_ptr.vmem [resolvable:$true] %s1340
      %s1342 = sshll.u32 %s10, 4
      %s1343 = int_to_ptr.hbm [resolvable:$true] %s1342
      %1345 = dma.vmem_to_hbm [thread:$0]  %s1341, 32, %s1343, [#allocation4]
    $region53: #{lstm_model_forward.1} parent=1 // pred_fallthru
      _
    // Predicated region
    $region54: #{lstm_model_forward.1} parent=1 // pred_check
      _
    $region55: #{lstm_model_forward.1} parent=1 // pred_check_branch
      %1347 = sbr.rel (0) target = $region57
    $region56: #{lstm_model_forward.1} parent=1 // pred_region
      %1349 = dma.done [#allocation4], 32
    $region57: #{lstm_model_forward.1} parent=1 // pred_fallthru
      _
    %1350 = vsyncpa [#allocation3], 1
    %1351 = vsyncpa [#allocation6], 1
    %1352 = vsyncpa [#allocation4], 1

</llo_original>
